<compile_context>
chip_gen: v7x
topology: tpu7x:2x2x1
jax: 0.10.0
libtpu: 0.0.40
codegen_flags: <defaults>
</compile_context>

<pallas_src>
import functools

import jax
import jax.numpy as jnp
from jax import lax
from jax.experimental import pallas as pl
from jax.experimental.pallas import tpu as pltpu


def _round_up(x, m):
    return ((x + m - 1) // m) * m


def sage_kernel(src_ref, dst_ref, ef_ref, nf_ref, invdeg_ref,
                wm_n_ref, wm_e_ref, bm_ref, wa_n_ref, wa_h_ref, ba_ref,
                out_ref, acc_ref, *, tn, te, n_pad):
    i = pl.program_id(0)                     # node-tile index  (parallel)
    k = pl.program_id(1)                     # edge-tile index  (reduction)

    @pl.when(k == 0)
    def _():
        acc_ref[...] = jnp.zeros_like(acc_ref)

    # ---- per-edge messages for this edge tile -------------------------------
    # Source-node gather as a one-hot selection matmul on the MXU
    # (selection rows are exact 0/1, so bf16 is lossless here).
    node_ids = lax.broadcasted_iota(jnp.int32, (te, n_pad), 1)
    sel = (node_ids == src_ref[...]).astype(jnp.bfloat16)            # [te, N_p]
    hsrc = jnp.dot(sel, nf_ref[...],
                   preferred_element_type=jnp.float32)               # [te, Din_p]

    m = (jnp.dot(hsrc.astype(jnp.bfloat16), wm_n_ref[...],
                 preferred_element_type=jnp.float32)
         + jnp.dot(ef_ref[...], wm_e_ref[...],
                   preferred_element_type=jnp.float32)
         + bm_ref[...])                                              # [te, Dout_p] f32

    # ---- aggregate messages into this node tile (one-hot dst tile @ m) ------
    row_ids = i * tn + lax.broadcasted_iota(jnp.int32, (tn, te), 0)
    adj = (row_ids == dst_ref[...]).astype(jnp.bfloat16)             # [tn, te]
    acc_ref[...] += jnp.dot(adj, m.astype(jnp.bfloat16),
                            preferred_element_type=jnp.float32)      # [tn, Dout_p]

    # ---- finalize: mean, apply, relu, lane-dense store -----------------------
    @pl.when(k == pl.num_programs(1) - 1)
    def _():
        h_neigh = acc_ref[...] * invdeg_ref[...]                     # f32 mean
        row0 = pl.multiple_of(i * tn, tn)
        nf_tile = nf_ref[pl.ds(row0, tn), :]                         # [tn, Din_p] bf16
        h = (jnp.dot(nf_tile, wa_n_ref[...],
                     preferred_element_type=jnp.float32)
             + jnp.dot(h_neigh.astype(jnp.bfloat16), wa_h_ref[...],
                       preferred_element_type=jnp.float32)
             + ba_ref[...])
        out_ref[...] = jnp.maximum(h, 0.0)


def sage_layer_forward(nfeats, efeats, src, dst, num_nodes,
                       W_msg, b_msg, W_apply, b_apply, *, tn=128, te=256):
    """nfeats: [N, 1, Din], efeats: [E, 1, Edim] -> [N, 1, Dout]."""
    N = num_nodes
    E = efeats.shape[0]
    Din = nfeats.shape[-1]
    Edim = efeats.shape[-1]
    Dout = W_msg.shape[0]

    LANE = 128
    Din_p = _round_up(Din, LANE)
    Edim_p = _round_up(Edim, LANE)
    Dout_p = _round_up(Dout, LANE)

    tn = _round_up(max(8, min(tn, _round_up(N, 8))), 8)
    N_p = _round_up(N, tn)
    te = _round_up(max(LANE, min(te, _round_up(E, LANE))), LANE)
    E_p = _round_up(E, te)
    n_tiles, e_tiles = N_p // tn, E_p // te

    # ---- pad + bf16-cast operands (zero padding keeps the math exact) -------
    nf2 = nfeats.reshape(N, Din)
    ef2 = efeats.reshape(E, Edim)
    nf_p = jnp.zeros((N_p, Din_p), jnp.bfloat16).at[:N, :Din].set(
        nf2.astype(jnp.bfloat16))
    ef_p = jnp.zeros((E_p, Edim_p), jnp.bfloat16).at[:E, :Edim].set(
        ef2.astype(jnp.bfloat16))

    # Edge endpoints as tiny int32 streams (built into one-hot tiles in-kernel).
    src_col = jnp.zeros((E_p, 1), jnp.int32).at[:E, 0].set(src.astype(jnp.int32))
    dst_row = jnp.full((1, E_p), -1, jnp.int32).at[0, :E].set(dst.astype(jnp.int32))

    # f32 inverse in-degree (0 for nodes with no incoming edges / padded nodes).
    deg = jnp.zeros((N_p,), jnp.float32).at[dst].add(1.0)
    inv_deg = jnp.where(deg > 0, 1.0 / jnp.maximum(deg, 1.0), 0.0).reshape(N_p, 1)

    # Split + pad the Linear weights (PyTorch Linear: y = x @ W.T + b).
    wm_n = jnp.zeros((Din_p, Dout_p), jnp.bfloat16).at[:Din, :Dout].set(
        W_msg[:, :Din].T.astype(jnp.bfloat16))
    wm_e = jnp.zeros((Edim_p, Dout_p), jnp.bfloat16).at[:Edim, :Dout].set(
        W_msg[:, Din:].T.astype(jnp.bfloat16))
    wa_n = jnp.zeros((Din_p, Dout_p), jnp.bfloat16).at[:Din, :Dout].set(
        W_apply[:, :Din].T.astype(jnp.bfloat16))
    wa_h = jnp.zeros((Dout_p, Dout_p), jnp.bfloat16).at[:Dout, :Dout].set(
        W_apply[:, Din:].T.astype(jnp.bfloat16))
    bm = jnp.zeros((1, Dout_p), jnp.float32).at[0, :Dout].set(
        b_msg.astype(jnp.float32))
    ba = jnp.zeros((1, Dout_p), jnp.float32).at[0, :Dout].set(
        b_apply.astype(jnp.float32))

    in_specs = [
        pl.BlockSpec((te, 1), lambda i, k: (k, 0)),            # src ids
        pl.BlockSpec((1, te), lambda i, k: (0, k)),            # dst ids
        pl.BlockSpec((te, Edim_p), lambda i, k: (k, 0)),       # edge feats
        pl.BlockSpec((N_p, Din_p), lambda i, k: (0, 0)),       # node feats (resident)
        pl.BlockSpec((tn, 1), lambda i, k: (i, 0)),            # 1/in_deg
        pl.BlockSpec((Din_p, Dout_p), lambda i, k: (0, 0)),    # Wm (node part)
        pl.BlockSpec((Edim_p, Dout_p), lambda i, k: (0, 0)),   # Wm (edge part)
        pl.BlockSpec((1, Dout_p), lambda i, k: (0, 0)),        # b_msg
        pl.BlockSpec((Din_p, Dout_p), lambda i, k: (0, 0)),    # Wa (node part)
        pl.BlockSpec((Dout_p, Dout_p), lambda i, k: (0, 0)),   # Wa (neigh part)
        pl.BlockSpec((1, Dout_p), lambda i, k: (0, 0)),        # b_apply
    ]
    out_spec = pl.BlockSpec((tn, Dout_p), lambda i, k: (i, 0))

    flops = (2 * E_p * N_p * Din_p * n_tiles            # in-kernel gather matmul
             + 2 * E_p * (Din_p + Edim_p) * Dout_p * n_tiles   # messages
             + 2 * N_p * E_p * Dout_p                   # aggregation
             + 2 * N_p * (Din_p + Dout_p) * Dout_p)     # apply
    bytes_accessed = ((src_col.size + dst_row.size) * 4 * n_tiles
                      + ef_p.size * 2 * n_tiles
                      + nf_p.size * 2
                      + inv_deg.size * 4
                      + (wm_n.size + wm_e.size + wa_n.size + wa_h.size) * 2
                      + (bm.size + ba.size) * 4
                      + N_p * Dout_p * 4)

    kernel = functools.partial(sage_kernel, tn=tn, te=te, n_pad=N_p)

    out_p = pl.pallas_call(
        kernel,
        out_shape=jax.ShapeDtypeStruct((N_p, Dout_p), jnp.float32),
        grid_spec=pltpu.PrefetchScalarGridSpec(
            num_scalar_prefetch=0,
            grid=(n_tiles, e_tiles),
            in_specs=in_specs,
            out_specs=out_spec,
            scratch_shapes=[pltpu.VMEM((tn, Dout_p), jnp.float32)]),
        compiler_params=pltpu.CompilerParams(
            dimension_semantics=("parallel", "arbitrary"),
            vmem_limit_bytes=32 * 1024 * 1024),
        cost_estimate=pl.CostEstimate(flops=flops, transcendentals=0,
                                      bytes_accessed=bytes_accessed),
    )(src_col, dst_row, ef_p, nf_p, inv_deg, wm_n, wm_e, bm, wa_n, wa_h, ba)

    # TODO(synk): for very large / very sparse graphs, replace the dense
    # one-hot (tn, te) aggregation tiles with a dst-sorted segment-mean using
    # PrefetchScalarGridSpec group offsets (removes the O(N*E*Dout) zero MACs).
    return out_p[:N, :Dout].reshape(N, 1, Dout)


def sage_layer_reference(nfeats, efeats, src, dst, num_nodes,
                         W_msg, b_msg, W_apply, b_apply):
    """Pure-JAX f32 reference matching the PyTorch/DGL semantics."""
    N = num_nodes
    Dout = W_msg.shape[0]
    nf2 = nfeats.reshape(N, -1)
    ef2 = efeats.reshape(efeats.shape[0], -1)
    x_msg = jnp.concatenate([nf2[src], ef2], axis=1)
    m = x_msg @ W_msg.T + b_msg
    summed = jnp.zeros((N, Dout), jnp.float32).at[dst].add(m)
    deg = jnp.zeros((N,), jnp.float32).at[dst].add(1.0)
    h_neigh = jnp.where(deg[:, None] > 0,
                        summed / jnp.maximum(deg, 1.0)[:, None], 0.0)
    x_ap = jnp.concatenate([nf2, h_neigh], axis=1)
    h = jnp.maximum(x_ap @ W_apply.T + b_apply, 0.0)
    return h.reshape(N, 1, Dout)


if __name__ == "__main__":
    # Small deterministic problem (sized to exercise a (2, 2) grid).
    N, E = 12, 200
    NDIM_IN, EDIMS, NDIM_OUT = 16, 8, 32

    key = jax.random.PRNGKey(0)
    k_nf, k_ef, k_src, k_dst, k_wm, k_bm, k_wa, k_ba = jax.random.split(key, 8)

    nfeats = jax.random.normal(k_nf, (N, 1, NDIM_IN), jnp.float32)
    efeats = jax.random.normal(k_ef, (E, 1, EDIMS), jnp.float32)
    src = jax.random.randint(k_src, (E,), 0, N)
    dst = jax.random.randint(k_dst, (E,), 0, N)

    # Deterministic parameter init (shapes match nn.Linear in __init__).
    W_msg = 0.1 * jax.random.normal(k_wm, (NDIM_OUT, NDIM_IN + EDIMS), jnp.float32)
    b_msg = 0.1 * jax.random.normal(k_bm, (NDIM_OUT,), jnp.float32)
    W_apply = 0.1 * jax.random.normal(k_wa, (NDIM_OUT, NDIM_IN + NDIM_OUT), jnp.float32)
    b_apply = 0.1 * jax.random.normal(k_ba, (NDIM_OUT,), jnp.float32)

    out = sage_layer_forward(nfeats, efeats, src, dst, N,
                             W_msg, b_msg, W_apply, b_apply, tn=8, te=128)
    out = jax.block_until_ready(out)

    ref = sage_layer_reference(nfeats, efeats, src, dst, N,
                               W_msg, b_msg, W_apply, b_apply)
    assert out.shape == (N, 1, NDIM_OUT)
    # bf16 matmul inputs with f32 accumulation -> ~1% end-to-end tolerance.
    assert jnp.allclose(out, ref, atol=5e-2, rtol=5e-2), "mismatch vs reference"

    print("KERNEL_OK")
</pallas_src>

<mosaic_0001>
module attributes {stable_mosaic.version = 11 : i64} {
  func.func @sage_kernel(%arg0: i32, %arg1: i32, %arg2: memref<128x1xi32, #tpu.memory_space<vmem>>, %arg3: memref<1x128xi32, #tpu.memory_space<vmem>>, %arg4: memref<128x128xbf16, #tpu.memory_space<vmem>>, %arg5: memref<16x128xbf16, #tpu.memory_space<vmem>>, %arg6: memref<8x1xf32, #tpu.memory_space<vmem>>, %arg7: memref<128x128xbf16, #tpu.memory_space<vmem>>, %arg8: memref<128x128xbf16, #tpu.memory_space<vmem>>, %arg9: memref<1x128xf32, #tpu.memory_space<vmem>>, %arg10: memref<128x128xbf16, #tpu.memory_space<vmem>>, %arg11: memref<128x128xbf16, #tpu.memory_space<vmem>>, %arg12: memref<1x128xf32, #tpu.memory_space<vmem>>, %arg13: memref<8x128xf32, #tpu.memory_space<vmem>>, %arg14: memref<8x128xf32, #tpu.memory_space<vmem>>) attributes {dimension_semantics = [#tpu.dimension_semantics<parallel>, #tpu.dimension_semantics<arbitrary>], iteration_bounds = array<i64: 2, 2>, scalar_prefetch = 0 : i64, scratch_operands = 1 : i64, tpu.core_type = #tpu.core_type<tc>, window_params = [{transform_indices = @transform_0, window_bounds = array<i64: 128, 1>}, {transform_indices = @transform_1, window_bounds = array<i64: 1, 128>}, {transform_indices = @transform_2, window_bounds = array<i64: 128, 128>}, {pipeline_mode = #tpu.pipeline_mode<synchronous>, transform_indices = @transform_3, window_bounds = array<i64: 16, 128>}, {transform_indices = @transform_4, window_bounds = array<i64: 8, 1>}, {pipeline_mode = #tpu.pipeline_mode<synchronous>, transform_indices = @transform_5, window_bounds = array<i64: 128, 128>}, {pipeline_mode = #tpu.pipeline_mode<synchronous>, transform_indices = @transform_6, window_bounds = array<i64: 128, 128>}, {pipeline_mode = #tpu.pipeline_mode<synchronous>, transform_indices = @transform_7, window_bounds = array<i64: 1, 128>}, {pipeline_mode = #tpu.pipeline_mode<synchronous>, transform_indices = @transform_8, window_bounds = array<i64: 128, 128>}, {pipeline_mode = #tpu.pipeline_mode<synchronous>, transform_indices = @transform_9, window_bounds = array<i64: 128, 128>}, {pipeline_mode = #tpu.pipeline_mode<synchronous>, transform_indices = @transform_10, window_bounds = array<i64: 1, 128>}, {transform_indices = @transform_11, window_bounds = array<i64: 8, 128>}]} {
    %c0_i32 = arith.constant 0 : i32
    %0 = arith.cmpi eq, %arg1, %c0_i32 : i32
    %1 = arith.extui %0 : i1 to i32
    %c0_i32_0 = arith.constant 0 : i32
    %2 = arith.cmpi ne, %1, %c0_i32_0 : i32
    scf.if %2 {
      %cst_22 = arith.constant 0.000000e+00 : f32
      %40 = vector.broadcast %cst_22 : f32 to vector<8x128xf32>
      %c0_23 = arith.constant 0 : index
      %c0_24 = arith.constant 0 : index
      %41 = vector.load %arg14[%c0_23, %c0_24] : memref<8x128xf32, #tpu.memory_space<vmem>>, vector<8x128xf32>
      tpu.vector_store %arg14[%c0_23, %c0_24], %40 {strides = array<i32>} : memref<8x128xf32, #tpu.memory_space<vmem>>, vector<8x128xf32>,
    } else {
    }
    %3 = tpu.iota {dimensions = array<i32: 1>} : vector<128x16xi32>
    %c0 = arith.constant 0 : index
    %c0_1 = arith.constant 0 : index
    %4 = vector.load %arg2[%c0, %c0_1] : memref<128x1xi32, #tpu.memory_space<vmem>>, vector<128x1xi32>
    %5 = vector.broadcast %4 : vector<128x1xi32> to vector<128x16xi32>
    %6 = arith.cmpi eq, %3, %5 : vector<128x16xi32>
    %7 = arith.extui %6 : vector<128x16xi1> to vector<128x16xi32>
    %8 = arith.sitofp %7 : vector<128x16xi32> to vector<128x16xf32>
    %9 = arith.truncf %8 : vector<128x16xf32> to vector<128x16xbf16>
    %c0_2 = arith.constant 0 : index
    %c0_3 = arith.constant 0 : index
    %10 = vector.load %arg5[%c0_2, %c0_3] : memref<16x128xbf16, #tpu.memory_space<vmem>>, vector<16x128xbf16>
    %cst = arith.constant dense<0.000000e+00> : vector<128x128xf32>
    %11 = tpu.matmul %9, %10, %cst {dimension_numbers = #tpu.dot_dimension_numbers<[1], [0], [0], [1], [0, 0, 1, 1], [], []>} : vector<128x16xbf16>, vector<16x128xbf16>, vector<128x128xf32> -> vector<128x128xf32>
    %12 = arith.truncf %11 : vector<128x128xf32> to vector<128x128xbf16>
    %c0_4 = arith.constant 0 : index
    %c0_5 = arith.constant 0 : index
    %13 = vector.load %arg7[%c0_4, %c0_5] : memref<128x128xbf16, #tpu.memory_space<vmem>>, vector<128x128xbf16>
    %cst_6 = arith.constant dense<0.000000e+00> : vector<128x128xf32>
    %14 = tpu.matmul %12, %13, %cst_6 {dimension_numbers = #tpu.dot_dimension_numbers<[1], [0], [0], [1], [0, 0, 1, 1], [], []>} : vector<128x128xbf16>, vector<128x128xbf16>, vector<128x128xf32> -> vector<128x128xf32>
    %c0_7 = arith.constant 0 : index
    %c0_8 = arith.constant 0 : index
    %15 = vector.load %arg4[%c0_7, %c0_8] : memref<128x128xbf16, #tpu.memory_space<vmem>>, vector<128x128xbf16>
    %c0_9 = arith.constant 0 : index
    %c0_10 = arith.constant 0 : index
    %16 = vector.load %arg8[%c0_9, %c0_10] : memref<128x128xbf16, #tpu.memory_space<vmem>>, vector<128x128xbf16>
    %cst_11 = arith.constant dense<0.000000e+00> : vector<128x128xf32>
    %17 = tpu.matmul %15, %16, %cst_11 {dimension_numbers = #tpu.dot_dimension_numbers<[1], [0], [0], [1], [0, 0, 1, 1], [], []>} : vector<128x128xbf16>, vector<128x128xbf16>, vector<128x128xf32> -> vector<128x128xf32>
    %18 = arith.addf %14, %17 : vector<128x128xf32>
    %c0_12 = arith.constant 0 : index
    %c0_13 = arith.constant 0 : index
    %19 = vector.load %arg9[%c0_12, %c0_13] : memref<1x128xf32, #tpu.memory_space<vmem>>, vector<1x128xf32>
    %20 = vector.broadcast %19 : vector<1x128xf32> to vector<128x128xf32>
    %21 = arith.addf %18, %20 : vector<128x128xf32>
    %c8_i32 = arith.constant 8 : i32
    %22 = arith.muli %arg0, %c8_i32 : i32
    %23 = tpu.iota {dimensions = array<i32: 0>} : vector<8x128xi32>
    %24 = vector.broadcast %22 : i32 to vector<8x128xi32>
    %25 = arith.addi %24, %23 : vector<8x128xi32>
    %c0_14 = arith.constant 0 : index
    %c0_15 = arith.constant 0 : index
    %26 = vector.load %arg3[%c0_14, %c0_15] : memref<1x128xi32, #tpu.memory_space<vmem>>, vector<1x128xi32>
    %27 = vector.broadcast %26 : vector<1x128xi32> to vector<8x128xi32>
    %28 = arith.cmpi eq, %25, %27 : vector<8x128xi32>
    %29 = arith.extui %28 : vector<8x128xi1> to vector<8x128xi32>
    %30 = arith.sitofp %29 : vector<8x128xi32> to vector<8x128xf32>
    %31 = arith.truncf %30 : vector<8x128xf32> to vector<8x128xbf16>
    %c0_16 = arith.constant 0 : index
    %c0_17 = arith.constant 0 : index
    %32 = vector.load %arg14[%c0_16, %c0_17] : memref<8x128xf32, #tpu.memory_space<vmem>>, vector<8x128xf32>
    %33 = arith.truncf %21 : vector<128x128xf32> to vector<128x128xbf16>
    %cst_18 = arith.constant dense<0.000000e+00> : vector<8x128xf32>
    %34 = tpu.matmul %31, %33, %cst_18 {dimension_numbers = #tpu.dot_dimension_numbers<[1], [0], [0], [1], [0, 0, 1, 1], [], []>} : vector<8x128xbf16>, vector<128x128xbf16>, vector<8x128xf32> -> vector<8x128xf32>
    %35 = arith.addf %32, %34 : vector<8x128xf32>
    %c0_19 = arith.constant 0 : index
    %c0_20 = arith.constant 0 : index
    %36 = vector.load %arg14[%c0_19, %c0_20] : memref<8x128xf32, #tpu.memory_space<vmem>>, vector<8x128xf32>
    tpu.vector_store %arg14[%c0_19, %c0_20], %35 {strides = array<i32>} : memref<8x128xf32, #tpu.memory_space<vmem>>, vector<8x128xf32>,
    %c1_i32 = arith.constant 1 : i32
    %37 = arith.cmpi eq, %arg1, %c1_i32 : i32
    %38 = arith.extui %37 : i1 to i32
    %c0_i32_21 = arith.constant 0 : i32
    %39 = arith.cmpi ne, %38, %c0_i32_21 : i32
    scf.if %39 {
      %c0_22 = arith.constant 0 : index
      %c0_23 = arith.constant 0 : index
      %40 = vector.load %arg14[%c0_22, %c0_23] : memref<8x128xf32, #tpu.memory_space<vmem>>, vector<8x128xf32>
      %c0_24 = arith.constant 0 : index
      %c0_25 = arith.constant 0 : index
      %41 = vector.load %arg6[%c0_24, %c0_25] : memref<8x1xf32, #tpu.memory_space<vmem>>, vector<8x1xf32>
      %42 = vector.broadcast %41 : vector<8x1xf32> to vector<8x128xf32>
      %43 = arith.mulf %40, %42 : vector<8x128xf32>
      %c8_i32_26 = arith.constant 8 : i32
      %44 = arith.muli %arg0, %c8_i32_26 : i32
      %45 = tpu.assume_multiple %44, 8 : i32
      %46 = arith.index_cast %45 : i32 to index
      %c0_27 = arith.constant 0 : index
      %47 = vector.load %arg5[%46, %c0_27] : memref<16x128xbf16, #tpu.memory_space<vmem>>, vector<8x128xbf16>
      %c0_28 = arith.constant 0 : index
      %c0_29 = arith.constant 0 : index
      %48 = vector.load %arg10[%c0_28, %c0_29] : memref<128x128xbf16, #tpu.memory_space<vmem>>, vector<128x128xbf16>
      %cst_30 = arith.constant dense<0.000000e+00> : vector<8x128xf32>
      %49 = tpu.matmul %47, %48, %cst_30 {dimension_numbers = #tpu.dot_dimension_numbers<[1], [0], [0], [1], [0, 0, 1, 1], [], []>} : vector<8x128xbf16>, vector<128x128xbf16>, vector<8x128xf32> -> vector<8x128xf32>
      %50 = arith.truncf %43 : vector<8x128xf32> to vector<8x128xbf16>
      %c0_31 = arith.constant 0 : index
      %c0_32 = arith.constant 0 : index
      %51 = vector.load %arg11[%c0_31, %c0_32] : memref<128x128xbf16, #tpu.memory_space<vmem>>, vector<128x128xbf16>
      %cst_33 = arith.constant dense<0.000000e+00> : vector<8x128xf32>
      %52 = tpu.matmul %50, %51, %cst_33 {dimension_numbers = #tpu.dot_dimension_numbers<[1], [0], [0], [1], [0, 0, 1, 1], [], []>} : vector<8x128xbf16>, vector<128x128xbf16>, vector<8x128xf32> -> vector<8x128xf32>
      %53 = arith.addf %49, %52 : vector<8x128xf32>
      %c0_34 = arith.constant 0 : index
      %c0_35 = arith.constant 0 : index
      %54 = vector.load %arg12[%c0_34, %c0_35] : memref<1x128xf32, #tpu.memory_space<vmem>>, vector<1x128xf32>
      %55 = vector.broadcast %54 : vector<1x128xf32> to vector<8x128xf32>
      %56 = arith.addf %53, %55 : vector<8x128xf32>
      %cst_36 = arith.constant 0.000000e+00 : f32
      %57 = vector.broadcast %cst_36 : f32 to vector<8x128xf32>
      %58 = arith.maximumf %56, %57 : vector<8x128xf32>
      %c0_37 = arith.constant 0 : index
      %c0_38 = arith.constant 0 : index
      %59 = vector.load %arg13[%c0_37, %c0_38] : memref<8x128xf32, #tpu.memory_space<vmem>>, vector<8x128xf32>
      tpu.vector_store %arg13[%c0_37, %c0_38], %58 {strides = array<i32>} : memref<8x128xf32, #tpu.memory_space<vmem>>, vector<8x128xf32>,
    } else {
    }
    return
  }
  func.func @transform_0(%arg0: i32, %arg1: i32) -> (i32, i32) {
    %c0_i32 = arith.constant 0 : i32
    %c0_i32_0 = arith.constant 0 : i32
    return %arg1, %c0_i32 : i32, i32
  }
  func.func @transform_1(%arg0: i32, %arg1: i32) -> (i32, i32) {
    %c0_i32 = arith.constant 0 : i32
    %c0_i32_0 = arith.constant 0 : i32
    return %c0_i32, %arg1 : i32, i32
  }
  func.func @transform_2(%arg0: i32, %arg1: i32) -> (i32, i32) {
    %c0_i32 = arith.constant 0 : i32
    %c0_i32_0 = arith.constant 0 : i32
    return %arg1, %c0_i32 : i32, i32
  }
  func.func @transform_3(%arg0: i32, %arg1: i32) -> (i32, i32) {
    %c0_i32 = arith.constant 0 : i32
    %c0_i32_0 = arith.constant 0 : i32
    %c0_i32_1 = arith.constant 0 : i32
    return %c0_i32, %c0_i32_0 : i32, i32
  }
  func.func @transform_4(%arg0: i32, %arg1: i32) -> (i32, i32) {
    %c0_i32 = arith.constant 0 : i32
    %c0_i32_0 = arith.constant 0 : i32
    return %arg0, %c0_i32 : i32, i32
  }
  func.func @transform_5(%arg0: i32, %arg1: i32) -> (i32, i32) {
    %c0_i32 = arith.constant 0 : i32
    %c0_i32_0 = arith.constant 0 : i32
    %c0_i32_1 = arith.constant 0 : i32
    return %c0_i32, %c0_i32_0 : i32, i32
  }
  func.func @transform_6(%arg0: i32, %arg1: i32) -> (i32, i32) {
    %c0_i32 = arith.constant 0 : i32
    %c0_i32_0 = arith.constant 0 : i32
    %c0_i32_1 = arith.constant 0 : i32
    return %c0_i32, %c0_i32_0 : i32, i32
  }
  func.func @transform_7(%arg0: i32, %arg1: i32) -> (i32, i32) {
    %c0_i32 = arith.constant 0 : i32
    %c0_i32_0 = arith.constant 0 : i32
    %c0_i32_1 = arith.constant 0 : i32
    return %c0_i32, %c0_i32_0 : i32, i32
  }
  func.func @transform_8(%arg0: i32, %arg1: i32) -> (i32, i32) {
    %c0_i32 = arith.constant 0 : i32
    %c0_i32_0 = arith.constant 0 : i32
    %c0_i32_1 = arith.constant 0 : i32
    return %c0_i32, %c0_i32_0 : i32, i32
  }
  func.func @transform_9(%arg0: i32, %arg1: i32) -> (i32, i32) {
    %c0_i32 = arith.constant 0 : i32
    %c0_i32_0 = arith.constant 0 : i32
    %c0_i32_1 = arith.constant 0 : i32
    return %c0_i32, %c0_i32_0 : i32, i32
  }
  func.func @transform_10(%arg0: i32, %arg1: i32) -> (i32, i32) {
    %c0_i32 = arith.constant 0 : i32
    %c0_i32_0 = arith.constant 0 : i32
    %c0_i32_1 = arith.constant 0 : i32
    return %c0_i32, %c0_i32_0 : i32, i32
  }
  func.func @transform_11(%arg0: i32, %arg1: i32) -> (i32, i32) {
    %c0_i32 = arith.constant 0 : i32
    %c0_i32_0 = arith.constant 0 : i32
    return %arg0, %c0_i32 : i32, i32
  }
}

</mosaic_0001>

<llo_original>
// kernel: tpu_custom_call.1
$region0: #{tpu_custom_call.1}
  #allocation0 [shape = 'u32[]', space=smem, size = 0x4, offset = 0x4, fixed_abs, tag = 'smem constant byte address 0x4 - core index']
  #allocation1 [shape = 'u32[144,128]{1,0:T(1,128)}', space=vmem, size = 0x12000, scoped, tag = 'internal scratch']
  #allocation2 [shape = 'f32[8,128]{1,0:T(8,128)}', space=vmem, size = 0x1000, scoped, tag = 'scratch operand']
  %s0 = inlined_call_operand.vmem [shape: s32[256,1], index: 0, kind: input, shape index: {}]
  %s1 = inlined_call_operand.vmem [shape: s32[1,256], index: 1, kind: input, shape index: {}]
  %s2 = inlined_call_operand.vmem [shape: bf16[256,128], index: 2, kind: input, shape index: {}]
  %s3 = inlined_call_operand.vmem [shape: bf16[16,128], index: 3, kind: input, shape index: {}]
  %s4 = inlined_call_operand.vmem [shape: f32[16,1], index: 4, kind: input, shape index: {}]
  %s5 = inlined_call_operand.vmem [shape: bf16[128,128], index: 5, kind: input, shape index: {}]
  %s6 = inlined_call_operand.vmem [shape: bf16[128,128], index: 6, kind: input, shape index: {}]
  %s7 = inlined_call_operand.vmem [shape: f32[1,128], index: 7, kind: input, shape index: {}]
  %s8 = inlined_call_operand.hbm [shape: bf16[128,128], index: 8, kind: input, shape index: {}]
  %s9 = inlined_call_operand.hbm [shape: bf16[128,128], index: 9, kind: input, shape index: {}]
  %s10 = inlined_call_operand.vmem [shape: f32[1,128], index: 10, kind: input, shape index: {}]
  %s11 = inlined_call_operand.hbm [shape: f32[16,128], index: 11, kind: output, shape index: {}]
  %s12 = sld [smem:[#allocation0]]
  $region93: #{tpu_custom_call.1} parent=0
    _
  %s14 = ssub.s32 1, %s12
  %s15 = scalar_select 0, %s14, %s12
  $region1: #{tpu_custom_call.1} parent=0
    #allocation3 [shape = 'u8[32768]{0}', space=vmem, size = 0x8000, scoped, tag = 'input window, operand 8, single buffered']
    #allocation4 [shape = 's32[2]{0}', space=sflag, size = 0x8, scoped, tag = 'scoped memory for tpu_custom_call.1']
    #allocation5 [shape = 's32[2]{0}', space=sflag, size = 0x8, scoped, tag = 'scoped memory for tpu_custom_call.1']
    #allocation6 [shape = 'u8[32768]{0}', space=vmem, size = 0x8000, scoped, tag = 'input window, operand 9, single buffered']
    #allocation7 [shape = 's32[1]{0}', space=sflag, size = 0x4, scoped, tag = 'scoped memory for tpu_custom_call.1']
    #allocation8 [shape = 'u8[8192]{0}', space=vmem, size = 0x2000, scoped, tag = 'output window, operand 0']
    %16 = vsyncpa [#allocation4], 0
    %17 = vsyncpa [#allocation7], 0
    %18 = vsyncpa [#allocation5], 0
    %s19 = scalar_lea.sflag [#allocation5], 1
    %20 = vsyncpa %s19, 0
    loop: start=0, step=1, limit=6
    $region2: #{tpu_custom_call.1} parent=1 // loop_pre_header
      _
    $region3: #{tpu_custom_call.1} parent=1 // loop_header
      %s22 = sphi 0, %s26
      %p23 = scmp.ge.s32.totalorder %s22, 6
      %s29 = sphi 0, %s41
      %s30 = sphi 0, %s37
      %s31 = sphi 0, %s29
      %s32 = sphi 0, %s30
      %s33 = sphi 0, %s31
      %s34 = sphi 0, %s32
      %s44 = sphi 0, %s46
      %s47 = sphi 0, %s44
      %s48 = sphi 0, %s47
      %s64 = sphi 0, %s48
      %s70 = sphi 0, %s72
      %s73 = sphi 0, %s70
      %s74 = sphi 0, %s73
      %s90 = sphi 0, %s74
      %s96 = sphi 0, %s98
      %s99 = sphi 0, %s96
      %s100 = sphi 0, %s99
      %s116 = sphi 0, %s100
      %s120 = sphi 0, %s120
      %s122 = sphi 0, %s120
      %s123 = sphi 0, %s122
      %s137 = sphi 0, %s123
      %s143 = sphi 0, %s145
      %s146 = sphi 0, %s143
      %s147 = sphi 0, %s146
      %s163 = sphi 0, %s147
      %s167 = sphi 0, %s167
      %s169 = sphi 0, %s167
      %s170 = sphi 0, %s169
      %s184 = sphi 0, %s170
      %s188 = sphi 0, %s188
      %s190 = sphi 0, %s188
      %s191 = sphi 0, %s190
      %s205 = sphi 0, %s191
      %s209 = sphi 0, %s209
      %s211 = sphi 0, %s209
      %s212 = sphi 0, %s211
      %s226 = sphi 0, %s212
      %s230 = sphi 0, %s230
      %s232 = sphi 0, %s230
      %s233 = sphi 0, %s232
      %s247 = sphi 0, %s233
      %s251 = sphi 0, %s251
      %s253 = sphi 0, %s251
      %s254 = sphi 0, %s253
      %s268 = sphi 0, %s254
      %s272 = sphi 0, %s272
      %s274 = sphi 0, %s272
      %s275 = sphi 0, %s274
      %s289 = sphi 0, %s275
      %s295 = sphi 0, %s297
      %s298 = sphi 0, %s295
      %s299 = sphi 0, %s298
      %s315 = sphi 0, %s299
    $region4: #{tpu_custom_call.1} parent=1 // loop_header_branch
      %25 = sbr.rel (%p23) target = $region8
    $region5: #{tpu_custom_call.1} parent=1 // loop_body
      %s27 = ssub.s32 %s22, 1
      %s28 = ssub.s32 %s22, 2
      %s35 = sadd.s32 1, %s30
      %p36 = scmp.ge.s32.totalorder %s35, 2
      %s37 = scalar_select %p36, 0, %s35
      %s38 = sadd.s32 1, %s29
      %s39 = scalar_select %p36, %s38, %s29
      %p40 = scmp.ge.s32.totalorder %s39, 2
      %s41 = scalar_select %p40, 0, %s39
      %s42 = ssub.s32 %s30, %s37
      %p43 = scmp.eq.s32.totalorder %s42, 0
      %s45 = sadd.s32 %s44, 1
      %s46 = scalar_select %p43, %s44, %s45
      %p49 = pneg %p43
      %p50 = scmp.eq.s32.totalorder %s22, 3
      %p51 = por %p49, %p50
      %p52 = scmp.ne.s32.totalorder %s44, %s47
      %p53 = scmp.eq.s32.totalorder %s22, 0
      %p54 = por %p52, %p53
      %p55 = scmp.ne.s32.totalorder %s44, %s47
      %p56 = scmp.eq.s32.totalorder %s27, 3
      %p57 = por %p55, %p56
      %p58 = scmp.ne.s32.totalorder %s47, %s48
      %p59 = scmp.eq.s32.totalorder %s27, 0
      %p60 = por %p58, %p59
      %p61 = scmp.ne.s32.totalorder %s47, %s48
      %p62 = scmp.eq.s32.totalorder %s28, 3
      %p63 = por %p61, %p62
      %p65 = scmp.ne.s32.totalorder %s48, %s64
      %p66 = scmp.eq.s32.totalorder %s28, 0
      %p67 = por %p65, %p66
      %s68 = ssub.s32 %s30, %s37
      %p69 = scmp.eq.s32.totalorder %s68, 0
      %s71 = sadd.s32 %s70, 1
      %s72 = scalar_select %p69, %s70, %s71
      %p75 = pneg %p69
      %p76 = scmp.eq.s32.totalorder %s22, 3
      %p77 = por %p75, %p76
      %p78 = scmp.ne.s32.totalorder %s70, %s73
      %p79 = scmp.eq.s32.totalorder %s22, 0
      %p80 = por %p78, %p79
      %p81 = scmp.ne.s32.totalorder %s70, %s73
      %p82 = scmp.eq.s32.totalorder %s27, 3
      %p83 = por %p81, %p82
      %p84 = scmp.ne.s32.totalorder %s73, %s74
      %p85 = scmp.eq.s32.totalorder %s27, 0
      %p86 = por %p84, %p85
      %p87 = scmp.ne.s32.totalorder %s73, %s74
      %p88 = scmp.eq.s32.totalorder %s28, 3
      %p89 = por %p87, %p88
      %p91 = scmp.ne.s32.totalorder %s74, %s90
      %p92 = scmp.eq.s32.totalorder %s28, 0
      %p93 = por %p91, %p92
      %s94 = ssub.s32 %s30, %s37
      %p95 = scmp.eq.s32.totalorder %s94, 0
      %s97 = sadd.s32 %s96, 1
      %s98 = scalar_select %p95, %s96, %s97
      %p101 = pneg %p95
      %p102 = scmp.eq.s32.totalorder %s22, 3
      %p103 = por %p101, %p102
      %p104 = scmp.ne.s32.totalorder %s96, %s99
      %p105 = scmp.eq.s32.totalorder %s22, 0
      %p106 = por %p104, %p105
      %p107 = scmp.ne.s32.totalorder %s96, %s99
      %p108 = scmp.eq.s32.totalorder %s27, 3
      %p109 = por %p107, %p108
      %p110 = scmp.ne.s32.totalorder %s99, %s100
      %p111 = scmp.eq.s32.totalorder %s27, 0
      %p112 = por %p110, %p111
      %p113 = scmp.ne.s32.totalorder %s99, %s100
      %p114 = scmp.eq.s32.totalorder %s28, 3
      %p115 = por %p113, %p114
      %p117 = scmp.ne.s32.totalorder %s100, %s116
      %p118 = scmp.eq.s32.totalorder %s28, 0
      %p119 = por %p117, %p118
      %s121 = sadd.s32 %s120, 1
      %p124 = scmp.eq.s32.totalorder %s22, 3
      %p125 = scmp.ne.s32.totalorder %s120, %s122
      %p126 = scmp.eq.s32.totalorder %s22, 0
      %p127 = por %p125, %p126
      %p128 = scmp.ne.s32.totalorder %s120, %s122
      %p129 = scmp.eq.s32.totalorder %s27, 3
      %p130 = por %p128, %p129
      %p131 = scmp.ne.s32.totalorder %s122, %s123
      %p132 = scmp.eq.s32.totalorder %s27, 0
      %p133 = por %p131, %p132
      %p134 = scmp.ne.s32.totalorder %s122, %s123
      %p135 = scmp.eq.s32.totalorder %s28, 3
      %p136 = por %p134, %p135
      %p138 = scmp.ne.s32.totalorder %s123, %s137
      %p139 = scmp.eq.s32.totalorder %s28, 0
      %p140 = por %p138, %p139
      %s141 = ssub.s32 %s29, %s41
      %p142 = scmp.eq.s32.totalorder %s141, 0
      %s144 = sadd.s32 %s143, 1
      %s145 = scalar_select %p142, %s143, %s144
      %p148 = pneg %p142
      %p149 = scmp.eq.s32.totalorder %s22, 3
      %p150 = por %p148, %p149
      %p151 = scmp.ne.s32.totalorder %s143, %s146
      %p152 = scmp.eq.s32.totalorder %s22, 0
      %p153 = por %p151, %p152
      %p154 = scmp.ne.s32.totalorder %s143, %s146
      %p155 = scmp.eq.s32.totalorder %s27, 3
      %p156 = por %p154, %p155
      %p157 = scmp.ne.s32.totalorder %s146, %s147
      %p158 = scmp.eq.s32.totalorder %s27, 0
      %p159 = por %p157, %p158
      %p160 = scmp.ne.s32.totalorder %s146, %s147
      %p161 = scmp.eq.s32.totalorder %s28, 3
      %p162 = por %p160, %p161
      %p164 = scmp.ne.s32.totalorder %s147, %s163
      %p165 = scmp.eq.s32.totalorder %s28, 0
      %p166 = por %p164, %p165
      %s168 = sadd.s32 %s167, 1
      %p171 = scmp.eq.s32.totalorder %s22, 3
      %p172 = scmp.ne.s32.totalorder %s167, %s169
      %p173 = scmp.eq.s32.totalorder %s22, 0
      %p174 = por %p172, %p173
      %p175 = scmp.ne.s32.totalorder %s167, %s169
      %p176 = scmp.eq.s32.totalorder %s27, 3
      %p177 = por %p175, %p176
      %p178 = scmp.ne.s32.totalorder %s169, %s170
      %p179 = scmp.eq.s32.totalorder %s27, 0
      %p180 = por %p178, %p179
      %p181 = scmp.ne.s32.totalorder %s169, %s170
      %p182 = scmp.eq.s32.totalorder %s28, 3
      %p183 = por %p181, %p182
      %p185 = scmp.ne.s32.totalorder %s170, %s184
      %p186 = scmp.eq.s32.totalorder %s28, 0
      %p187 = por %p185, %p186
      %s189 = sadd.s32 %s188, 1
      %p192 = scmp.eq.s32.totalorder %s22, 3
      %p193 = scmp.ne.s32.totalorder %s188, %s190
      %p194 = scmp.eq.s32.totalorder %s22, 0
      %p195 = por %p193, %p194
      %p196 = scmp.ne.s32.totalorder %s188, %s190
      %p197 = scmp.eq.s32.totalorder %s27, 3
      %p198 = por %p196, %p197
      %p199 = scmp.ne.s32.totalorder %s190, %s191
      %p200 = scmp.eq.s32.totalorder %s27, 0
      %p201 = por %p199, %p200
      %p202 = scmp.ne.s32.totalorder %s190, %s191
      %p203 = scmp.eq.s32.totalorder %s28, 3
      %p204 = por %p202, %p203
      %p206 = scmp.ne.s32.totalorder %s191, %s205
      %p207 = scmp.eq.s32.totalorder %s28, 0
      %p208 = por %p206, %p207
      %s210 = sadd.s32 %s209, 1
      %p213 = scmp.eq.s32.totalorder %s22, 3
      %p214 = scmp.ne.s32.totalorder %s209, %s211
      %p215 = scmp.eq.s32.totalorder %s22, 0
      %p216 = por %p214, %p215
      %p217 = scmp.ne.s32.totalorder %s209, %s211
      %p218 = scmp.eq.s32.totalorder %s27, 3
      %p219 = por %p217, %p218
      %p220 = scmp.ne.s32.totalorder %s211, %s212
      %p221 = scmp.eq.s32.totalorder %s27, 0
      %p222 = por %p220, %p221
      %p223 = scmp.ne.s32.totalorder %s211, %s212
      %p224 = scmp.eq.s32.totalorder %s28, 3
      %p225 = por %p223, %p224
      %p227 = scmp.ne.s32.totalorder %s212, %s226
      %p228 = scmp.eq.s32.totalorder %s28, 0
      %p229 = por %p227, %p228
      %s231 = sadd.s32 %s230, 1
      %p234 = scmp.eq.s32.totalorder %s22, 3
      %p235 = scmp.ne.s32.totalorder %s230, %s232
      %p236 = scmp.eq.s32.totalorder %s22, 0
      %p237 = por %p235, %p236
      %p238 = scmp.ne.s32.totalorder %s230, %s232
      %p239 = scmp.eq.s32.totalorder %s27, 3
      %p240 = por %p238, %p239
      %p241 = scmp.ne.s32.totalorder %s232, %s233
      %p242 = scmp.eq.s32.totalorder %s27, 0
      %p243 = por %p241, %p242
      %p244 = scmp.ne.s32.totalorder %s232, %s233
      %p245 = scmp.eq.s32.totalorder %s28, 3
      %p246 = por %p244, %p245
      %p248 = scmp.ne.s32.totalorder %s233, %s247
      %p249 = scmp.eq.s32.totalorder %s28, 0
      %p250 = por %p248, %p249
      %s252 = sadd.s32 %s251, 1
      %p255 = scmp.eq.s32.totalorder %s22, 3
      %p256 = scmp.ne.s32.totalorder %s251, %s253
      %p257 = scmp.eq.s32.totalorder %s22, 0
      %p258 = por %p256, %p257
      %p259 = scmp.ne.s32.totalorder %s251, %s253
      %p260 = scmp.eq.s32.totalorder %s27, 3
      %p261 = por %p259, %p260
      %p262 = scmp.ne.s32.totalorder %s253, %s254
      %p263 = scmp.eq.s32.totalorder %s27, 0
      %p264 = por %p262, %p263
      %p265 = scmp.ne.s32.totalorder %s253, %s254
      %p266 = scmp.eq.s32.totalorder %s28, 3
      %p267 = por %p265, %p266
      %p269 = scmp.ne.s32.totalorder %s254, %s268
      %p270 = scmp.eq.s32.totalorder %s28, 0
      %p271 = por %p269, %p270
      %s273 = sadd.s32 %s272, 1
      %p276 = scmp.eq.s32.totalorder %s22, 3
      %p277 = scmp.ne.s32.totalorder %s272, %s274
      %p278 = scmp.eq.s32.totalorder %s22, 0
      %p279 = por %p277, %p278
      %p280 = scmp.ne.s32.totalorder %s272, %s274
      %p281 = scmp.eq.s32.totalorder %s27, 3
      %p282 = por %p280, %p281
      %p283 = scmp.ne.s32.totalorder %s274, %s275
      %p284 = scmp.eq.s32.totalorder %s27, 0
      %p285 = por %p283, %p284
      %p286 = scmp.ne.s32.totalorder %s274, %s275
      %p287 = scmp.eq.s32.totalorder %s28, 3
      %p288 = por %p286, %p287
      %p290 = scmp.ne.s32.totalorder %s275, %s289
      %p291 = scmp.eq.s32.totalorder %s28, 0
      %p292 = por %p290, %p291
      %s293 = ssub.s32 %s29, %s41
      %p294 = scmp.eq.s32.totalorder %s293, 0
      %s296 = sadd.s32 %s295, 1
      %s297 = scalar_select %p294, %s295, %s296
      %p300 = pneg %p294
      %p301 = scmp.eq.s32.totalorder %s22, 3
      %p302 = por %p300, %p301
      %p303 = scmp.ne.s32.totalorder %s295, %s298
      %p304 = scmp.eq.s32.totalorder %s22, 0
      %p305 = por %p303, %p304
      %p306 = scmp.ne.s32.totalorder %s295, %s298
      %p307 = scmp.eq.s32.totalorder %s27, 3
      %p308 = por %p306, %p307
      %p309 = scmp.ne.s32.totalorder %s298, %s299
      %p310 = scmp.eq.s32.totalorder %s27, 0
      %p311 = por %p309, %p310
      %p312 = scmp.ne.s32.totalorder %s298, %s299
      %p313 = scmp.eq.s32.totalorder %s28, 3
      %p314 = por %p312, %p313
      %p316 = scmp.ne.s32.totalorder %s299, %s315
      %p317 = scmp.eq.s32.totalorder %s28, 0
      %p318 = por %p316, %p317
      %p319 = scmp.le.s32.totalorder 1, %s22
      %p320 = scmp.lt.s32.totalorder %s22, 5
      %p321 = pnand %p319, %p320
      %p322 = pneg %p321
      // Predicated region
      $region9: #{tpu_custom_call.1} parent=5 // pred_check
        _
      $region10: #{tpu_custom_call.1} parent=5 // pred_check_branch
        %324 = sbr.rel (%p321) target = $region12
      $region11: #{tpu_custom_call.1} parent=5 // pred_region
        %s325 = ssub.s32 %s22, 1
        // Predicated region
        $region13: #{tpu_custom_call.1} parent=11 // pred_check
          %p326 = pneg %p133
        $region14: #{tpu_custom_call.1} parent=11 // pred_check_branch
          %328 = sbr.rel (%p326) target = $region16
        $region15: #{tpu_custom_call.1} parent=11 // pred_region
          _
        $region16: #{tpu_custom_call.1} parent=11 // pred_fallthru
          _
        // Predicated region
        $region17: #{tpu_custom_call.1} parent=11 // pred_check
          %p329 = pneg %p180
        $region18: #{tpu_custom_call.1} parent=11 // pred_check_branch
          %331 = sbr.rel (%p329) target = $region20
        $region19: #{tpu_custom_call.1} parent=11 // pred_region
          _
        $region20: #{tpu_custom_call.1} parent=11 // pred_fallthru
          _
        // Predicated region
        $region21: #{tpu_custom_call.1} parent=11 // pred_check
          %p332 = pneg %p201
        $region22: #{tpu_custom_call.1} parent=11 // pred_check_branch
          %334 = sbr.rel (%p332) target = $region24
        $region23: #{tpu_custom_call.1} parent=11 // pred_region
          _
        $region24: #{tpu_custom_call.1} parent=11 // pred_fallthru
          _
        // Predicated region
        $region25: #{tpu_custom_call.1} parent=11 // pred_check
          %p335 = pneg %p222
        $region26: #{tpu_custom_call.1} parent=11 // pred_check_branch
          %337 = sbr.rel (%p335) target = $region28
        $region27: #{tpu_custom_call.1} parent=11 // pred_region
          _
        $region28: #{tpu_custom_call.1} parent=11 // pred_fallthru
          _
        // Predicated region
        $region29: #{tpu_custom_call.1} parent=11 // pred_check
          %p338 = pneg %p243
        $region30: #{tpu_custom_call.1} parent=11 // pred_check_branch
          %340 = sbr.rel (%p338) target = $region32
        $region31: #{tpu_custom_call.1} parent=11 // pred_region
          %s342 = ssub.s32 1024, 1024
          %343 = vsyncadd [#allocation4], %s342
          %s344 = sshll.u32 [#allocation3], 4
          %s345 = int_to_ptr.vmem [resolvable:$true] %s344
          %350 = dma.hbm_to_vmem [thread:$0]  %s8, 1024, %s345, [#allocation4], 64, 64, 4
        $region32: #{tpu_custom_call.1} parent=11 // pred_fallthru
          _
        // Predicated region
        $region33: #{tpu_custom_call.1} parent=11 // pred_check
          %p351 = pneg %p264
        $region34: #{tpu_custom_call.1} parent=11 // pred_check_branch
          %353 = sbr.rel (%p351) target = $region36
        $region35: #{tpu_custom_call.1} parent=11 // pred_region
          %s355 = ssub.s32 1024, 1024
          %356 = vsyncadd [#allocation7], %s355
          %s357 = sshll.u32 [#allocation6], 4
          %s358 = int_to_ptr.vmem [resolvable:$true] %s357
          %363 = dma.hbm_to_vmem [thread:$0]  %s9, 1024, %s358, [#allocation7], 64, 64, 4
        $region36: #{tpu_custom_call.1} parent=11 // pred_fallthru
          _
        // Predicated region
        $region37: #{tpu_custom_call.1} parent=11 // pred_check
          %p364 = pneg %p285
        $region38: #{tpu_custom_call.1} parent=11 // pred_check_branch
          %366 = sbr.rel (%p364) target = $region40
        $region39: #{tpu_custom_call.1} parent=11 // pred_region
          _
        $region40: #{tpu_custom_call.1} parent=11 // pred_fallthru
          _
      $region12: #{tpu_custom_call.1} parent=5 // pred_fallthru
        _
      %p367 = scmp.lt.s32.totalorder %s22, 4
      // Predicated region
      $region41: #{tpu_custom_call.1} parent=5 // pred_check
        %p368 = pneg %p367
      $region42: #{tpu_custom_call.1} parent=5 // pred_check_branch
        %370 = sbr.rel (%p368) target = $region44
      $region43: #{tpu_custom_call.1} parent=5 // pred_region
        // Predicated region
        $region45: #{tpu_custom_call.1} parent=43 // pred_check
          %p371 = pneg %p54
        $region46: #{tpu_custom_call.1} parent=43 // pred_check_branch
          %373 = sbr.rel (%p371) target = $region48
        $region47: #{tpu_custom_call.1} parent=43 // pred_region
          %s374 = smul.u32 16, %s30
          %p375 = scmp.lt.s32.totalorder %s374, 31
          %s376 = scalar_select %p375, %s374, 31
          %s377 = smul.addr %s376, 8
          %s378 = scalar_lea.vmem %s0, %s377
          %s379 = smul.u32 16, %s30
        $region48: #{tpu_custom_call.1} parent=43 // pred_fallthru
          _
        // Predicated region
        $region49: #{tpu_custom_call.1} parent=43 // pred_check
          %p380 = pneg %p80
        $region50: #{tpu_custom_call.1} parent=43 // pred_check_branch
          %382 = sbr.rel (%p380) target = $region52
        $region51: #{tpu_custom_call.1} parent=43 // pred_region
          %p383 = scmp.lt.s32.totalorder %s30, 1
          %s384 = scalar_select %p383, %s30, 1
          %s385 = scalar_lea.vmem %s1, %s384
        $region52: #{tpu_custom_call.1} parent=43 // pred_fallthru
          _
        // Predicated region
        $region53: #{tpu_custom_call.1} parent=43 // pred_check
          %p386 = pneg %p106
        $region54: #{tpu_custom_call.1} parent=43 // pred_check_branch
          %388 = sbr.rel (%p386) target = $region56
        $region55: #{tpu_custom_call.1} parent=43 // pred_region
          %s389 = smul.u32 16, %s30
          %p390 = scmp.lt.s32.totalorder %s389, 31
          %s391 = scalar_select %p390, %s389, 31
          %s392 = smul.addr %s391, 4
          %s393 = scalar_lea.vmem %s2, %s392
          %s394 = smul.u32 16, %s30
        $region56: #{tpu_custom_call.1} parent=43 // pred_fallthru
          _
        // Predicated region
        $region57: #{tpu_custom_call.1} parent=43 // pred_check
          %p395 = pneg %p153
        $region58: #{tpu_custom_call.1} parent=43 // pred_check_branch
          %397 = sbr.rel (%p395) target = $region60
        $region59: #{tpu_custom_call.1} parent=43 // pred_region
          %p398 = scmp.lt.s32.totalorder %s29, 1
          %s399 = scalar_select %p398, %s29, 1
          %s400 = smul.addr %s399, 8
          %s401 = scalar_lea.vmem %s4, %s400
        $region60: #{tpu_custom_call.1} parent=43 // pred_fallthru
          _
      $region44: #{tpu_custom_call.1} parent=5 // pred_fallthru
        _
      %p402 = scmp.le.s32.totalorder 1, %s22
      %p403 = scmp.lt.s32.totalorder %s22, 5
      %p404 = pnand %p402, %p403
      %p405 = pneg %p404
      // Predicated region
      $region61: #{tpu_custom_call.1} parent=5 // pred_check
        _
      $region62: #{tpu_custom_call.1} parent=5 // pred_check_branch
        %407 = sbr.rel (%p404) target = $region64
      $region63: #{tpu_custom_call.1} parent=5 // pred_region
        %s408 = ssub.s32 %s22, 1
        // Predicated region
        $region65: #{tpu_custom_call.1} parent=63 // pred_check
          %p409 = pneg %p243
        $region66: #{tpu_custom_call.1} parent=63 // pred_check_branch
          %411 = sbr.rel (%p409) target = $region68
        $region67: #{tpu_custom_call.1} parent=63 // pred_region
          %412 = dma.done [#allocation4], 1024
        $region68: #{tpu_custom_call.1} parent=63 // pred_fallthru
          _
        // Predicated region
        $region69: #{tpu_custom_call.1} parent=63 // pred_check
          %p413 = pneg %p264
        $region70: #{tpu_custom_call.1} parent=63 // pred_check_branch
          %415 = sbr.rel (%p413) target = $region72
        $region71: #{tpu_custom_call.1} parent=63 // pred_region
          %416 = dma.done [#allocation7], 1024
        $region72: #{tpu_custom_call.1} parent=63 // pred_fallthru
          _
        %s417 = smul.u32 16, %s32
        %p418 = scmp.lt.s32.totalorder %s417, 31
        %s419 = scalar_select %p418, %s417, 31
        %s420 = smul.addr %s419, 8
        %s421 = scalar_lea.vmem %s0, %s420
        %p422 = pneg %p60
        %p423 = pneg %p57
        %p424 = scmp.lt.s32.totalorder %s32, 1
        %s425 = scalar_select %p424, %s32, 1
        %s426 = scalar_lea.vmem %s1, %s425
        %p427 = pneg %p86
        %p428 = pneg %p83
        %s429 = smul.u32 16, %s32
        %p430 = scmp.lt.s32.totalorder %s429, 31
        %s431 = scalar_select %p430, %s429, 31
        %s432 = smul.addr %s431, 4
        %s433 = scalar_lea.vmem %s2, %s432
        %p434 = pneg %p112
        %p435 = pneg %p109
        %p436 = pneg %p133
        %p437 = pneg %p130
        %p438 = scmp.lt.s32.totalorder %s31, 1
        %s439 = scalar_select %p438, %s31, 1
        %s440 = smul.addr %s439, 8
        %s441 = scalar_lea.vmem %s4, %s440
        %p442 = pneg %p159
        %p443 = pneg %p156
        %p444 = pneg %p180
        %p445 = pneg %p177
        %p446 = pneg %p201
        %p447 = pneg %p198
        %p448 = pneg %p222
        %p449 = pneg %p219
        %p450 = pneg %p243
        %p451 = pneg %p240
        %p452 = pneg %p264
        %p453 = pneg %p261
        %p454 = pneg %p285
        %p455 = pneg %p282
        %p456 = pneg %p311
        %p457 = pneg %p308
        %s458 = sand.u32 %s298, 1
        %s459 = scalar_lea.sflag [#allocation5], %s458
        %s460 = sand.u32 %s298, 1
        %s461 = smul.addr %s460, 8
        %s462 = scalar_lea.vmem [#allocation8], %s461
        %s463 = smul.u32 16, %s32
        %p464 = scmp.lt.s32.totalorder %s463, 31
        %s465 = scalar_select %p464, %s463, 31
        %s466 = smul.addr %s465, 8
        %s467 = scalar_lea.vmem %s0, %s466
        %s468 = smul.u32 16, %s32
        %p469 = scmp.lt.s32.totalorder %s32, 1
        %s470 = scalar_select %p469, %s32, 1
        %s471 = scalar_lea.vmem %s1, %s470
        %s472 = smul.u32 16, %s32
        %p473 = scmp.lt.s32.totalorder %s472, 31
        %s474 = scalar_select %p473, %s472, 31
        %s475 = smul.addr %s474, 4
        %s476 = scalar_lea.vmem %s2, %s475
        %s477 = smul.u32 16, %s32
        %p478 = scmp.lt.s32.totalorder %s31, 1
        %s479 = scalar_select %p478, %s31, 1
        %s480 = smul.addr %s479, 8
        %s481 = scalar_lea.vmem %s4, %s480
        %p483 = scmp.eq.s32.totalorder %s32, 0
        // Predicated region
        $region73: #{tpu_custom_call.1} parent=63 // pred_check
          %p484 = pneg %p483
        $region74: #{tpu_custom_call.1} parent=63 // pred_check_branch
          %486 = sbr.rel (%p484) target = $region76
        $region75: #{tpu_custom_call.1} parent=63 // pred_region
          %487 = vst [vmem:[#allocation2] sm:$0xff] 0.0
        $region76: #{tpu_custom_call.1} parent=63 // pred_fallthru
          _
        %v488 = vlaneseq
        %v489 = vand.u32 %v488, 127
        %v490 = vld [vmem:[%s467] sm:$0xff]
        %v491 = vld [vmem:[%s467 + $0x8] sm:$0xff]
        %v492 = vld [vmem:[%s467 + $0x10] sm:$0xff]
        %v493 = vld [vmem:[%s467 + $0x18] sm:$0xff]
        %v494 = vld [vmem:[%s467 + $0x20] sm:$0xff]
        %v495 = vld [vmem:[%s467 + $0x28] sm:$0xff]
        %v496 = vld [vmem:[%s467 + $0x30] sm:$0xff]
        %v497 = vld [vmem:[%s467 + $0x38] sm:$0xff]
        %v498 = vld [vmem:[%s467 + $0x40] sm:$0xff]
        %v499 = vld [vmem:[%s467 + $0x48] sm:$0xff]
        %v500 = vld [vmem:[%s467 + $0x50] sm:$0xff]
        %v501 = vld [vmem:[%s467 + $0x58] sm:$0xff]
        %v502 = vld [vmem:[%s467 + $0x60] sm:$0xff]
        %v503 = vld [vmem:[%s467 + $0x68] sm:$0xff]
        %v504 = vld [vmem:[%s467 + $0x70] sm:$0xff]
        %v505 = vld [vmem:[%s467 + $0x78] sm:$0xff]
        %506 = vset.pattern.permute.xlu0 0
        %507 = vperm.xlu0 %506, %v490
        %v508 = vpop.permute.xlu0 %507
        %509 = vset.pattern.permute.xlu0 0
        %510 = vperm.xlu0 %509, %v491
        %v511 = vpop.permute.xlu0 %510
        %512 = vset.pattern.permute.xlu0 0
        %513 = vperm.xlu0 %512, %v492
        %v514 = vpop.permute.xlu0 %513
        %515 = vset.pattern.permute.xlu0 0
        %516 = vperm.xlu0 %515, %v493
        %v517 = vpop.permute.xlu0 %516
        %518 = vset.pattern.permute.xlu0 0
        %519 = vperm.xlu0 %518, %v494
        %v520 = vpop.permute.xlu0 %519
        %521 = vset.pattern.permute.xlu0 0
        %522 = vperm.xlu0 %521, %v495
        %v523 = vpop.permute.xlu0 %522
        %524 = vset.pattern.permute.xlu0 0
        %525 = vperm.xlu0 %524, %v496
        %v526 = vpop.permute.xlu0 %525
        %527 = vset.pattern.permute.xlu0 0
        %528 = vperm.xlu0 %527, %v497
        %v529 = vpop.permute.xlu0 %528
        %530 = vset.pattern.permute.xlu0 0
        %531 = vperm.xlu0 %530, %v498
        %v532 = vpop.permute.xlu0 %531
        %533 = vset.pattern.permute.xlu0 0
        %534 = vperm.xlu0 %533, %v499
        %v535 = vpop.permute.xlu0 %534
        %536 = vset.pattern.permute.xlu0 0
        %537 = vperm.xlu0 %536, %v500
        %v538 = vpop.permute.xlu0 %537
        %539 = vset.pattern.permute.xlu0 0
        %540 = vperm.xlu0 %539, %v501
        %v541 = vpop.permute.xlu0 %540
        %542 = vset.pattern.permute.xlu0 0
        %543 = vperm.xlu0 %542, %v502
        %v544 = vpop.permute.xlu0 %543
        %545 = vset.pattern.permute.xlu0 0
        %546 = vperm.xlu0 %545, %v503
        %v547 = vpop.permute.xlu0 %546
        %548 = vset.pattern.permute.xlu0 0
        %549 = vperm.xlu0 %548, %v504
        %v550 = vpop.permute.xlu0 %549
        %551 = vset.pattern.permute.xlu0 0
        %552 = vperm.xlu0 %551, %v505
        %v553 = vpop.permute.xlu0 %552
        %vm554 = vcmp.eq.s32.totalorder %v489, %v508
        %vm555 = vcmp.eq.s32.totalorder %v489, %v511
        %vm556 = vcmp.eq.s32.totalorder %v489, %v514
        %vm557 = vcmp.eq.s32.totalorder %v489, %v517
        %vm558 = vcmp.eq.s32.totalorder %v489, %v520
        %vm559 = vcmp.eq.s32.totalorder %v489, %v523
        %vm560 = vcmp.eq.s32.totalorder %v489, %v526
        %vm561 = vcmp.eq.s32.totalorder %v489, %v529
        %vm562 = vcmp.eq.s32.totalorder %v489, %v532
        %vm563 = vcmp.eq.s32.totalorder %v489, %v535
        %vm564 = vcmp.eq.s32.totalorder %v489, %v538
        %vm565 = vcmp.eq.s32.totalorder %v489, %v541
        %vm566 = vcmp.eq.s32.totalorder %v489, %v544
        %vm567 = vcmp.eq.s32.totalorder %v489, %v547
        %vm568 = vcmp.eq.s32.totalorder %v489, %v550
        %vm569 = vcmp.eq.s32.totalorder %v489, %v553
        %v570 = vsel %vm554, 1, 0
        %v571 = vsel %vm555, 1, 0
        %v572 = vsel %vm556, 1, 0
        %v573 = vsel %vm557, 1, 0
        %v574 = vsel %vm558, 1, 0
        %v575 = vsel %vm559, 1, 0
        %v576 = vsel %vm560, 1, 0
        %v577 = vsel %vm561, 1, 0
        %v578 = vsel %vm562, 1, 0
        %v579 = vsel %vm563, 1, 0
        %v580 = vsel %vm564, 1, 0
        %v581 = vsel %vm565, 1, 0
        %v582 = vsel %vm566, 1, 0
        %v583 = vsel %vm567, 1, 0
        %v584 = vsel %vm568, 1, 0
        %v585 = vsel %vm569, 1, 0
        %v586 = vcvt.s32.f32 %v570
        %v587 = vcvt.s32.f32 %v571
        %v588 = vcvt.s32.f32 %v572
        %v589 = vcvt.s32.f32 %v573
        %v590 = vcvt.s32.f32 %v574
        %v591 = vcvt.s32.f32 %v575
        %v592 = vcvt.s32.f32 %v576
        %v593 = vcvt.s32.f32 %v577
        %v594 = vcvt.s32.f32 %v578
        %v595 = vcvt.s32.f32 %v579
        %v596 = vcvt.s32.f32 %v580
        %v597 = vcvt.s32.f32 %v581
        %v598 = vcvt.s32.f32 %v582
        %v599 = vcvt.s32.f32 %v583
        %v600 = vcvt.s32.f32 %v584
        %v601 = vcvt.s32.f32 %v585
        %v602 = vpack.c.bf16 %v587, %v586
        %v603 = vpack.c.bf16 %v589, %v588
        %v604 = vpack.c.bf16 %v591, %v590
        %v605 = vpack.c.bf16 %v593, %v592
        %v606 = vpack.c.bf16 %v595, %v594
        %v607 = vpack.c.bf16 %v597, %v596
        %v608 = vpack.c.bf16 %v599, %v598
        %v609 = vpack.c.bf16 %v601, %v600
        %v610 = vld [vmem:[%s3] sm:$0xf]
        %v611 = vld [vmem:[%s3 + $0x4] sm:$0xf]
        %v614 = vunpack.c.l.b16 %v610
        %v615 = vunpack.c.l.b16 %v611
        %v616 = vpack.c.b16 %v615, %v614
        %vm618 = vcmask 130048
        %v620 = vsel %vm618, %v602, 0
        %v623 = vsel %vm618, %v603, 0
        %v626 = vsel %vm618, %v604, 0
        %v629 = vsel %vm618, %v605, 0
        %v632 = vsel %vm618, %v606, 0
        %v635 = vsel %vm618, %v607, 0
        %v638 = vsel %vm618, %v608, 0
        %v641 = vsel %vm618, %v609, 0
        %643 = vmatprep.subr.bf16.mxu0 0
        %644 = vmatpush1.bf16.msra.mxu0 %v616
        %645 = vmatprep.subr.bf16.mxu0 0
        %646 = vmatpush1.bf16.msra.mxu0 0
        %647 = vmatprep.subr.bf16.mxu0 0
        %648 = vmatpush1.bf16.msra.mxu0 0
        %649 = vmatprep.subr.bf16.mxu0 0
        %650 = vmatpush1.bf16.msra.mxu0 0
        %651 = vmatprep.subr.bf16.mxu0 0
        %652 = vmatpush1.bf16.msra.mxu0 0
        %653 = vmatprep.subr.bf16.mxu0 0
        %654 = vmatpush1.bf16.msra.mxu0 0
        %655 = vmatprep.subr.bf16.mxu0 0
        %656 = vmatpush1.bf16.msra.mxu0 0
        %657 = vmatprep.subr.bf16.mxu0 0
        %658 = vmatpush1.bf16.msra.mxu0 0
        %659 = vmatprep.subr.bf16.mxu0 0
        %660 = vmatpush1.bf16.msra.mxu0 0
        %661 = vmatprep.subr.bf16.mxu0 0
        %662 = vmatpush1.bf16.msra.mxu0 0
        %663 = vmatprep.subr.bf16.mxu0 0
        %664 = vmatpush1.bf16.msra.mxu0 0
        %665 = vmatprep.subr.bf16.mxu0 0
        %666 = vmatpush1.bf16.msra.mxu0 0
        %667 = vmatprep.subr.bf16.mxu0 0
        %668 = vmatpush1.bf16.msra.mxu0 0
        %669 = vmatprep.subr.bf16.mxu0 0
        %670 = vmatpush1.bf16.msra.mxu0 0
        %671 = vmatprep.subr.bf16.mxu0 0
        %672 = vmatpush1.bf16.msra.mxu0 0
        %673 = vmatprep.subr.bf16.mxu0 0
        %674 = vmatpush1.bf16.msra.mxu0 0
        %675 = vmatprep.mubr.bf16.mxu0 0
        %676 = vmatmul.mubr.bf16.gmra.mrb[0].mxu0 %v620
        %v677 = vpop.f32.mrb[0].mxu0
        %v678 = vadd.f32 0.0, %v677
        %v679 = vpop.f32.mrb[0].mxu0
        %v680 = vpop.f32.mrb[0].mxu0
        %v681 = vadd.f32 0.0, %v680
        %v682 = vpop.f32.mrb[0].mxu0
        %683 = vmatprep.mubr.bf16.mxu0 0
        %684 = vmatmul.mubr.bf16.gmra.mrb[0].mxu0 %v623
        %v685 = vpop.f32.mrb[0].mxu0
        %v686 = vadd.f32 0.0, %v685
        %v687 = vpop.f32.mrb[0].mxu0
        %v688 = vpop.f32.mrb[0].mxu0
        %v689 = vadd.f32 0.0, %v688
        %v690 = vpop.f32.mrb[0].mxu0
        %691 = vmatprep.mubr.bf16.mxu0 0
        %692 = vmatmul.mubr.bf16.gmra.mrb[0].mxu0 %v626
        %v693 = vpop.f32.mrb[0].mxu0
        %v694 = vadd.f32 0.0, %v693
        %v695 = vpop.f32.mrb[0].mxu0
        %v696 = vpop.f32.mrb[0].mxu0
        %v697 = vadd.f32 0.0, %v696
        %v698 = vpop.f32.mrb[0].mxu0
        %699 = vmatprep.mubr.bf16.mxu0 0
        %700 = vmatmul.mubr.bf16.gmra.mrb[0].mxu0 %v629
        %v701 = vpop.f32.mrb[0].mxu0
        %v702 = vadd.f32 0.0, %v701
        %v703 = vpop.f32.mrb[0].mxu0
        %v704 = vpop.f32.mrb[0].mxu0
        %v705 = vadd.f32 0.0, %v704
        %v706 = vpop.f32.mrb[0].mxu0
        %707 = vmatprep.mubr.bf16.mxu0 0
        %708 = vmatmul.mubr.bf16.gmra.mrb[0].mxu0 %v632
        %v709 = vpop.f32.mrb[0].mxu0
        %v710 = vadd.f32 0.0, %v709
        %v711 = vpop.f32.mrb[0].mxu0
        %v712 = vpop.f32.mrb[0].mxu0
        %v713 = vadd.f32 0.0, %v712
        %v714 = vpop.f32.mrb[0].mxu0
        %715 = vmatprep.mubr.bf16.mxu0 0
        %716 = vmatmul.mubr.bf16.gmra.mrb[0].mxu0 %v635
        %v717 = vpop.f32.mrb[0].mxu0
        %v718 = vadd.f32 0.0, %v717
        %v719 = vpop.f32.mrb[0].mxu0
        %v720 = vpop.f32.mrb[0].mxu0
        %v721 = vadd.f32 0.0, %v720
        %v722 = vpop.f32.mrb[0].mxu0
        %723 = vmatprep.mubr.bf16.mxu0 0
        %724 = vmatmul.mubr.bf16.gmra.mrb[0].mxu0 %v638
        %v725 = vpop.f32.mrb[0].mxu0
        %v726 = vadd.f32 0.0, %v725
        %v727 = vpop.f32.mrb[0].mxu0
        %v728 = vpop.f32.mrb[0].mxu0
        %v729 = vadd.f32 0.0, %v728
        %v730 = vpop.f32.mrb[0].mxu0
        %731 = vmatprep.mubr.bf16.mxu0 0
        %732 = vmatmul.mubr.bf16.gmra.mrb[0].mxu0 %v641
        %v733 = vpop.f32.mrb[0].mxu0
        %v734 = vadd.f32 0.0, %v733
        %v735 = vpop.f32.mrb[0].mxu0
        %v736 = vpop.f32.mrb[0].mxu0
        %v737 = vadd.f32 0.0, %v736
        %v738 = vpop.f32.mrb[0].mxu0
        %739 = vdwg.mxu0
        %v740 = vpack.c.bf16 %v681, %v678
        %v741 = vpack.c.bf16 %v689, %v686
        %v742 = vpack.c.bf16 %v697, %v694
        %v743 = vpack.c.bf16 %v705, %v702
        %v744 = vpack.c.bf16 %v713, %v710
        %v745 = vpack.c.bf16 %v721, %v718
        %v746 = vpack.c.bf16 %v729, %v726
        %v747 = vpack.c.bf16 %v737, %v734
        %v748 = vld [vmem:[%s5] sm:$0xf]
        %v749 = vld [vmem:[%s5 + $0x4] sm:$0xf]
        %v750 = vld [vmem:[%s5 + $0x8] sm:$0xf]
        %v751 = vld [vmem:[%s5 + $0xc] sm:$0xf]
        %v752 = vld [vmem:[%s5 + $0x10] sm:$0xf]
        %v753 = vld [vmem:[%s5 + $0x14] sm:$0xf]
        %v754 = vld [vmem:[%s5 + $0x18] sm:$0xf]
        %v755 = vld [vmem:[%s5 + $0x1c] sm:$0xf]
        %v756 = vld [vmem:[%s5 + $0x20] sm:$0xf]
        %v757 = vld [vmem:[%s5 + $0x24] sm:$0xf]
        %v758 = vld [vmem:[%s5 + $0x28] sm:$0xf]
        %v759 = vld [vmem:[%s5 + $0x2c] sm:$0xf]
        %v760 = vld [vmem:[%s5 + $0x30] sm:$0xf]
        %v761 = vld [vmem:[%s5 + $0x34] sm:$0xf]
        %v762 = vld [vmem:[%s5 + $0x38] sm:$0xf]
        %v763 = vld [vmem:[%s5 + $0x3c] sm:$0xf]
        %v764 = vld [vmem:[%s476] sm:$0xf]
        %v765 = vld [vmem:[%s476 + $0x4] sm:$0xf]
        %v766 = vld [vmem:[%s476 + $0x8] sm:$0xf]
        %v767 = vld [vmem:[%s476 + $0xc] sm:$0xf]
        %v768 = vld [vmem:[%s476 + $0x10] sm:$0xf]
        %v769 = vld [vmem:[%s476 + $0x14] sm:$0xf]
        %v770 = vld [vmem:[%s476 + $0x18] sm:$0xf]
        %v771 = vld [vmem:[%s476 + $0x1c] sm:$0xf]
        %v772 = vld [vmem:[%s476 + $0x20] sm:$0xf]
        %v773 = vld [vmem:[%s476 + $0x24] sm:$0xf]
        %v774 = vld [vmem:[%s476 + $0x28] sm:$0xf]
        %v775 = vld [vmem:[%s476 + $0x2c] sm:$0xf]
        %v776 = vld [vmem:[%s476 + $0x30] sm:$0xf]
        %v777 = vld [vmem:[%s476 + $0x34] sm:$0xf]
        %v778 = vld [vmem:[%s476 + $0x38] sm:$0xf]
        %v779 = vld [vmem:[%s476 + $0x3c] sm:$0xf]
        %v780 = vld [vmem:[%s6] sm:$0xf]
        %v781 = vld [vmem:[%s6 + $0x4] sm:$0xf]
        %v782 = vld [vmem:[%s6 + $0x8] sm:$0xf]
        %v783 = vld [vmem:[%s6 + $0xc] sm:$0xf]
        %v784 = vld [vmem:[%s6 + $0x10] sm:$0xf]
        %v785 = vld [vmem:[%s6 + $0x14] sm:$0xf]
        %v786 = vld [vmem:[%s6 + $0x18] sm:$0xf]
        %v787 = vld [vmem:[%s6 + $0x1c] sm:$0xf]
        %v788 = vld [vmem:[%s6 + $0x20] sm:$0xf]
        %v789 = vld [vmem:[%s6 + $0x24] sm:$0xf]
        %v790 = vld [vmem:[%s6 + $0x28] sm:$0xf]
        %v791 = vld [vmem:[%s6 + $0x2c] sm:$0xf]
        %v792 = vld [vmem:[%s6 + $0x30] sm:$0xf]
        %v793 = vld [vmem:[%s6 + $0x34] sm:$0xf]
        %v794 = vld [vmem:[%s6 + $0x38] sm:$0xf]
        %v795 = vld [vmem:[%s6 + $0x3c] sm:$0xf]
        %v812 = vunpack.c.l.b16 %v764
        %v813 = vunpack.c.l.b16 %v765
        %v814 = vunpack.c.l.b16 %v766
        %v815 = vunpack.c.l.b16 %v767
        %v816 = vunpack.c.l.b16 %v768
        %v817 = vunpack.c.l.b16 %v769
        %v818 = vunpack.c.l.b16 %v770
        %v819 = vunpack.c.l.b16 %v771
        %v820 = vunpack.c.l.b16 %v772
        %v821 = vunpack.c.l.b16 %v773
        %v822 = vunpack.c.l.b16 %v774
        %v823 = vunpack.c.l.b16 %v775
        %v824 = vunpack.c.l.b16 %v776
        %v825 = vunpack.c.l.b16 %v777
        %v826 = vunpack.c.l.b16 %v778
        %v827 = vunpack.c.l.b16 %v779
        %v828 = vpack.c.b16 %v813, %v812
        %v829 = vpack.c.b16 %v815, %v814
        %v830 = vpack.c.b16 %v817, %v816
        %v831 = vpack.c.b16 %v819, %v818
        %v832 = vpack.c.b16 %v821, %v820
        %v833 = vpack.c.b16 %v823, %v822
        %v834 = vpack.c.b16 %v825, %v824
        %v835 = vpack.c.b16 %v827, %v826
        %v860 = vunpack.c.l.b16 %v780
        %v861 = vunpack.c.l.b16 %v781
        %v862 = vunpack.c.l.b16 %v782
        %v863 = vunpack.c.l.b16 %v783
        %v864 = vunpack.c.l.b16 %v784
        %v865 = vunpack.c.l.b16 %v785
        %v866 = vunpack.c.l.b16 %v786
        %v867 = vunpack.c.l.b16 %v787
        %v868 = vunpack.c.l.b16 %v788
        %v869 = vunpack.c.l.b16 %v789
        %v870 = vunpack.c.l.b16 %v790
        %v871 = vunpack.c.l.b16 %v791
        %v872 = vunpack.c.l.b16 %v792
        %v873 = vunpack.c.l.b16 %v793
        %v874 = vunpack.c.l.b16 %v794
        %v875 = vunpack.c.l.b16 %v795
        %v876 = vpack.c.b16 %v861, %v860
        %v877 = vpack.c.b16 %v863, %v862
        %v878 = vpack.c.b16 %v865, %v864
        %v879 = vpack.c.b16 %v867, %v866
        %v880 = vpack.c.b16 %v869, %v868
        %v881 = vpack.c.b16 %v871, %v870
        %v882 = vpack.c.b16 %v873, %v872
        %v883 = vpack.c.b16 %v875, %v874
        %892 = vmatprep.subr.bf16.mxu0 0
        %893 = vmatpush1.bf16.msra.mxu0 %v876
        %894 = vmatprep.subr.bf16.mxu0 0
        %895 = vmatpush1.bf16.msra.mxu0 %v877
        %896 = vmatprep.subr.bf16.mxu0 0
        %897 = vmatpush1.bf16.msra.mxu0 %v878
        %898 = vmatprep.subr.bf16.mxu0 0
        %899 = vmatpush1.bf16.msra.mxu0 %v879
        %900 = vmatprep.subr.bf16.mxu0 0
        %901 = vmatpush1.bf16.msra.mxu0 %v880
        %902 = vmatprep.subr.bf16.mxu0 0
        %903 = vmatpush1.bf16.msra.mxu0 %v881
        %904 = vmatprep.subr.bf16.mxu0 0
        %905 = vmatpush1.bf16.msra.mxu0 %v882
        %906 = vmatprep.subr.bf16.mxu0 0
        %907 = vmatpush1.bf16.msra.mxu0 %v883
        %908 = vmatprep.subr.bf16.mxu0 0
        %909 = vmatpush1.bf16.msra.mxu0 0
        %910 = vmatprep.subr.bf16.mxu0 0
        %911 = vmatpush1.bf16.msra.mxu0 0
        %912 = vmatprep.subr.bf16.mxu0 0
        %913 = vmatpush1.bf16.msra.mxu0 0
        %914 = vmatprep.subr.bf16.mxu0 0
        %915 = vmatpush1.bf16.msra.mxu0 0
        %916 = vmatprep.subr.bf16.mxu0 0
        %917 = vmatpush1.bf16.msra.mxu0 0
        %918 = vmatprep.subr.bf16.mxu0 0
        %919 = vmatpush1.bf16.msra.mxu0 0
        %920 = vmatprep.subr.bf16.mxu0 0
        %921 = vmatpush1.bf16.msra.mxu0 0
        %922 = vmatprep.subr.bf16.mxu0 0
        %923 = vmatpush1.bf16.msra.mxu0 0
        %924 = vmatprep.mubr.bf16.mxu0 0
        %925 = vmatmul.mubr.bf16.gmra.mrb[0].mxu0 %v828
        %v926 = vpop.f32.mrb[0].mxu0
        %v927 = vadd.f32 0.0, %v926
        %v928 = vpop.f32.mrb[0].mxu0
        %v929 = vpop.f32.mrb[0].mxu0
        %v930 = vadd.f32 0.0, %v929
        %v931 = vpop.f32.mrb[0].mxu0
        %932 = vmatprep.mubr.bf16.mxu0 0
        %933 = vmatmul.mubr.bf16.gmra.mrb[0].mxu0 %v829
        %v934 = vpop.f32.mrb[0].mxu0
        %v935 = vadd.f32 0.0, %v934
        %v936 = vpop.f32.mrb[0].mxu0
        %v937 = vpop.f32.mrb[0].mxu0
        %v938 = vadd.f32 0.0, %v937
        %v939 = vpop.f32.mrb[0].mxu0
        %940 = vmatprep.mubr.bf16.mxu0 0
        %941 = vmatmul.mubr.bf16.gmra.mrb[0].mxu0 %v830
        %v942 = vpop.f32.mrb[0].mxu0
        %v943 = vadd.f32 0.0, %v942
        %v944 = vpop.f32.mrb[0].mxu0
        %v945 = vpop.f32.mrb[0].mxu0
        %v946 = vadd.f32 0.0, %v945
        %v947 = vpop.f32.mrb[0].mxu0
        %948 = vmatprep.mubr.bf16.mxu0 0
        %949 = vmatmul.mubr.bf16.gmra.mrb[0].mxu0 %v831
        %v950 = vpop.f32.mrb[0].mxu0
        %v951 = vadd.f32 0.0, %v950
        %v952 = vpop.f32.mrb[0].mxu0
        %v953 = vpop.f32.mrb[0].mxu0
        %v954 = vadd.f32 0.0, %v953
        %v955 = vpop.f32.mrb[0].mxu0
        %956 = vmatprep.mubr.bf16.mxu0 0
        %957 = vmatmul.mubr.bf16.gmra.mrb[0].mxu0 %v832
        %v958 = vpop.f32.mrb[0].mxu0
        %v959 = vadd.f32 0.0, %v958
        %v960 = vpop.f32.mrb[0].mxu0
        %v961 = vpop.f32.mrb[0].mxu0
        %v962 = vadd.f32 0.0, %v961
        %v963 = vpop.f32.mrb[0].mxu0
        %964 = vmatprep.mubr.bf16.mxu0 0
        %965 = vmatmul.mubr.bf16.gmra.mrb[0].mxu0 %v833
        %v966 = vpop.f32.mrb[0].mxu0
        %v967 = vadd.f32 0.0, %v966
        %v968 = vpop.f32.mrb[0].mxu0
        %v969 = vpop.f32.mrb[0].mxu0
        %v970 = vadd.f32 0.0, %v969
        %v971 = vpop.f32.mrb[0].mxu0
        %972 = vmatprep.mubr.bf16.mxu0 0
        %973 = vmatmul.mubr.bf16.gmra.mrb[0].mxu0 %v834
        %v974 = vpop.f32.mrb[0].mxu0
        %v975 = vadd.f32 0.0, %v974
        %v976 = vpop.f32.mrb[0].mxu0
        %v977 = vpop.f32.mrb[0].mxu0
        %v978 = vadd.f32 0.0, %v977
        %v979 = vpop.f32.mrb[0].mxu0
        %980 = vmatprep.mubr.bf16.mxu0 0
        %981 = vmatmul.mubr.bf16.gmra.mrb[0].mxu0 %v835
        %v982 = vpop.f32.mrb[0].mxu0
        %v983 = vadd.f32 0.0, %v982
        %v984 = vpop.f32.mrb[0].mxu0
        %v985 = vpop.f32.mrb[0].mxu0
        %v986 = vadd.f32 0.0, %v985
        %v987 = vpop.f32.mrb[0].mxu0
        %988 = vdwg.mxu0
        %v1005 = vunpack.c.l.b16 %v748
        %v1006 = vunpack.c.l.b16 %v749
        %v1007 = vunpack.c.l.b16 %v750
        %v1008 = vunpack.c.l.b16 %v751
        %v1009 = vunpack.c.l.b16 %v752
        %v1010 = vunpack.c.l.b16 %v753
        %v1011 = vunpack.c.l.b16 %v754
        %v1012 = vunpack.c.l.b16 %v755
        %v1013 = vunpack.c.l.b16 %v756
        %v1014 = vunpack.c.l.b16 %v757
        %v1015 = vunpack.c.l.b16 %v758
        %v1016 = vunpack.c.l.b16 %v759
        %v1017 = vunpack.c.l.b16 %v760
        %v1018 = vunpack.c.l.b16 %v761
        %v1019 = vunpack.c.l.b16 %v762
        %v1020 = vunpack.c.l.b16 %v763
        %v1021 = vpack.c.b16 %v1006, %v1005
        %v1022 = vpack.c.b16 %v1008, %v1007
        %v1023 = vpack.c.b16 %v1010, %v1009
        %v1024 = vpack.c.b16 %v1012, %v1011
        %v1025 = vpack.c.b16 %v1014, %v1013
        %v1026 = vpack.c.b16 %v1016, %v1015
        %v1027 = vpack.c.b16 %v1018, %v1017
        %v1028 = vpack.c.b16 %v1020, %v1019
        %1037 = vmatprep.subr.bf16.mxu0 0
        %1038 = vmatpush1.bf16.msra.mxu0 %v1021
        %1039 = vmatprep.subr.bf16.mxu0 0
        %1040 = vmatpush1.bf16.msra.mxu0 %v1022
        %1041 = vmatprep.subr.bf16.mxu0 0
        %1042 = vmatpush1.bf16.msra.mxu0 %v1023
        %1043 = vmatprep.subr.bf16.mxu0 0
        %1044 = vmatpush1.bf16.msra.mxu0 %v1024
        %1045 = vmatprep.subr.bf16.mxu0 0
        %1046 = vmatpush1.bf16.msra.mxu0 %v1025
        %1047 = vmatprep.subr.bf16.mxu0 0
        %1048 = vmatpush1.bf16.msra.mxu0 %v1026
        %1049 = vmatprep.subr.bf16.mxu0 0
        %1050 = vmatpush1.bf16.msra.mxu0 %v1027
        %1051 = vmatprep.subr.bf16.mxu0 0
        %1052 = vmatpush1.bf16.msra.mxu0 %v1028
        %1053 = vmatprep.subr.bf16.mxu0 0
        %1054 = vmatpush1.bf16.msra.mxu0 0
        %1055 = vmatprep.subr.bf16.mxu0 0
        %1056 = vmatpush1.bf16.msra.mxu0 0
        %1057 = vmatprep.subr.bf16.mxu0 0
        %1058 = vmatpush1.bf16.msra.mxu0 0
        %1059 = vmatprep.subr.bf16.mxu0 0
        %1060 = vmatpush1.bf16.msra.mxu0 0
        %1061 = vmatprep.subr.bf16.mxu0 0
        %1062 = vmatpush1.bf16.msra.mxu0 0
        %1063 = vmatprep.subr.bf16.mxu0 0
        %1064 = vmatpush1.bf16.msra.mxu0 0
        %1065 = vmatprep.subr.bf16.mxu0 0
        %1066 = vmatpush1.bf16.msra.mxu0 0
        %1067 = vmatprep.subr.bf16.mxu0 0
        %1068 = vmatpush1.bf16.msra.mxu0 0
        %1069 = vmatprep.mubr.bf16.mxu0 0
        %1070 = vmatmul.mubr.bf16.gmra.mrb[0].mxu0 %v740
        %v1071 = vpop.f32.mrb[0].mxu0
        %v1072 = vadd.f32 %v927, %v1071
        %v1073 = vpop.f32.mrb[0].mxu0
        %v1074 = vpop.f32.mrb[0].mxu0
        %v1075 = vadd.f32 %v930, %v1074
        %v1076 = vpop.f32.mrb[0].mxu0
        %1077 = vmatprep.mubr.bf16.mxu0 0
        %1078 = vmatmul.mubr.bf16.gmra.mrb[0].mxu0 %v741
        %v1079 = vpop.f32.mrb[0].mxu0
        %v1080 = vadd.f32 %v935, %v1079
        %v1081 = vpop.f32.mrb[0].mxu0
        %v1082 = vpop.f32.mrb[0].mxu0
        %v1083 = vadd.f32 %v938, %v1082
        %v1084 = vpop.f32.mrb[0].mxu0
        %1085 = vmatprep.mubr.bf16.mxu0 0
        %1086 = vmatmul.mubr.bf16.gmra.mrb[0].mxu0 %v742
        %v1087 = vpop.f32.mrb[0].mxu0
        %v1088 = vadd.f32 %v943, %v1087
        %v1089 = vpop.f32.mrb[0].mxu0
        %v1090 = vpop.f32.mrb[0].mxu0
        %v1091 = vadd.f32 %v946, %v1090
        %v1092 = vpop.f32.mrb[0].mxu0
        %1093 = vmatprep.mubr.bf16.mxu0 0
        %1094 = vmatmul.mubr.bf16.gmra.mrb[0].mxu0 %v743
        %v1095 = vpop.f32.mrb[0].mxu0
        %v1096 = vadd.f32 %v951, %v1095
        %v1097 = vpop.f32.mrb[0].mxu0
        %v1098 = vpop.f32.mrb[0].mxu0
        %v1099 = vadd.f32 %v954, %v1098
        %v1100 = vpop.f32.mrb[0].mxu0
        %1101 = vmatprep.mubr.bf16.mxu0 0
        %1102 = vmatmul.mubr.bf16.gmra.mrb[0].mxu0 %v744
        %v1103 = vpop.f32.mrb[0].mxu0
        %v1104 = vadd.f32 %v959, %v1103
        %v1105 = vpop.f32.mrb[0].mxu0
        %v1106 = vpop.f32.mrb[0].mxu0
        %v1107 = vadd.f32 %v962, %v1106
        %v1108 = vpop.f32.mrb[0].mxu0
        %1109 = vmatprep.mubr.bf16.mxu0 0
        %1110 = vmatmul.mubr.bf16.gmra.mrb[0].mxu0 %v745
        %v1111 = vpop.f32.mrb[0].mxu0
        %v1112 = vadd.f32 %v967, %v1111
        %v1113 = vpop.f32.mrb[0].mxu0
        %v1114 = vpop.f32.mrb[0].mxu0
        %v1115 = vadd.f32 %v970, %v1114
        %v1116 = vpop.f32.mrb[0].mxu0
        %1117 = vmatprep.mubr.bf16.mxu0 0
        %1118 = vmatmul.mubr.bf16.gmra.mrb[0].mxu0 %v746
        %v1119 = vpop.f32.mrb[0].mxu0
        %v1120 = vadd.f32 %v975, %v1119
        %v1121 = vpop.f32.mrb[0].mxu0
        %v1122 = vpop.f32.mrb[0].mxu0
        %v1123 = vadd.f32 %v978, %v1122
        %v1124 = vpop.f32.mrb[0].mxu0
        %1125 = vmatprep.mubr.bf16.mxu0 0
        %1126 = vmatmul.mubr.bf16.gmra.mrb[0].mxu0 %v747
        %v1127 = vpop.f32.mrb[0].mxu0
        %v1128 = vadd.f32 %v983, %v1127
        %v1129 = vpop.f32.mrb[0].mxu0
        %v1130 = vpop.f32.mrb[0].mxu0
        %v1131 = vadd.f32 %v986, %v1130
        %v1132 = vpop.f32.mrb[0].mxu0
        %1133 = vdwg.mxu0
        %v1134 = vld [vmem:[%s7] sm:$0x1]
        %v1136 = vlaneseq
        %v1137 = vshrl.u32 %v1136, 7
        %v1138 = vsub.s32 0, %v1137
        %v1139 = vrot.slane %v1134, %v1138
        %v1141 = vadd.f32 %v1072, %v1139
        %v1142 = vadd.f32 %v1075, %v1139
        %v1143 = vadd.f32 %v1080, %v1139
        %v1144 = vadd.f32 %v1083, %v1139
        %v1145 = vadd.f32 %v1088, %v1139
        %v1146 = vadd.f32 %v1091, %v1139
        %v1147 = vadd.f32 %v1096, %v1139
        %v1148 = vadd.f32 %v1099, %v1139
        %v1149 = vadd.f32 %v1104, %v1139
        %v1150 = vadd.f32 %v1107, %v1139
        %v1151 = vadd.f32 %v1112, %v1139
        %v1152 = vadd.f32 %v1115, %v1139
        %v1153 = vadd.f32 %v1120, %v1139
        %v1154 = vadd.f32 %v1123, %v1139
        %v1155 = vadd.f32 %v1128, %v1139
        %v1156 = vadd.f32 %v1131, %v1139
        %s1157 = smul.u32 %s31, 8
        %v1158 = vlaneseq
        %v1159 = vshrl.u32 %v1158, 7
        %v1160 = vstv %s1157
        %v1161 = vadd.s32 %v1160, %v1159
        %v1162 = vld [vmem:[%s471] sm:$0x1]
        %v1163 = vlaneseq
        %v1164 = vshrl.u32 %v1163, 7
        %v1165 = vsub.s32 0, %v1164
        %v1166 = vrot.slane %v1162, %v1165
        %vm1167 = vcmp.eq.s32.totalorder %v1161, %v1166
        %v1168 = vsel %vm1167, 1, 0
        %v1169 = vcvt.s32.f32 %v1168
        %v1170 = vpack.c.bf16 %v1169, %v1169
        %v1171 = vld [vmem:[#allocation2] sm:$0xff]
        %v1172 = vpack.c.bf16 %v1142, %v1141
        %v1173 = vpack.c.bf16 %v1144, %v1143
        %v1174 = vpack.c.bf16 %v1146, %v1145
        %v1175 = vpack.c.bf16 %v1148, %v1147
        %v1176 = vpack.c.bf16 %v1150, %v1149
        %v1177 = vpack.c.bf16 %v1152, %v1151
        %v1178 = vpack.c.bf16 %v1154, %v1153
        %v1179 = vpack.c.bf16 %v1156, %v1155
        %1180 = vmatprep.subr.bf16.mxu0 0
        %1181 = vmatpush1.bf16.msra.mxu0 %v1172
        %1182 = vmatprep.subr.bf16.mxu0 0
        %1183 = vmatpush1.bf16.msra.mxu0 %v1173
        %1184 = vmatprep.subr.bf16.mxu0 0
        %1185 = vmatpush1.bf16.msra.mxu0 %v1174
        %1186 = vmatprep.subr.bf16.mxu0 0
        %1187 = vmatpush1.bf16.msra.mxu0 %v1175
        %1188 = vmatprep.subr.bf16.mxu0 0
        %1189 = vmatpush1.bf16.msra.mxu0 %v1176
        %1190 = vmatprep.subr.bf16.mxu0 0
        %1191 = vmatpush1.bf16.msra.mxu0 %v1177
        %1192 = vmatprep.subr.bf16.mxu0 0
        %1193 = vmatpush1.bf16.msra.mxu0 %v1178
        %1194 = vmatprep.subr.bf16.mxu0 0
        %1195 = vmatpush1.bf16.msra.mxu0 %v1179
        %1196 = vmatprep.subr.bf16.mxu0 0
        %1197 = vmatpush1.bf16.msra.mxu0 0
        %1198 = vmatprep.subr.bf16.mxu0 0
        %1199 = vmatpush1.bf16.msra.mxu0 0
        %1200 = vmatprep.subr.bf16.mxu0 0
        %1201 = vmatpush1.bf16.msra.mxu0 0
        %1202 = vmatprep.subr.bf16.mxu0 0
        %1203 = vmatpush1.bf16.msra.mxu0 0
        %1204 = vmatprep.subr.bf16.mxu0 0
        %1205 = vmatpush1.bf16.msra.mxu0 0
        %1206 = vmatprep.subr.bf16.mxu0 0
        %1207 = vmatpush1.bf16.msra.mxu0 0
        %1208 = vmatprep.subr.bf16.mxu0 0
        %1209 = vmatpush1.bf16.msra.mxu0 0
        %1210 = vmatprep.subr.bf16.mxu0 0
        %1211 = vmatpush1.bf16.msra.mxu0 0
        %1212 = vmatprep.mubr.bf16.mxu0 0
        %1213 = vmatmul.mubr.bf16.gmra.mrb[0].mxu0 %v1170
        %v1214 = vpop.f32.mrb[0].mxu0
        %v1215 = vadd.f32 0.0, %v1214
        %v1216 = vpop.f32.mrb[0].mxu0
        %v1217 = vpop.f32.mrb[0].mxu0
        %v1218 = vpop.f32.mrb[0].mxu0
        %1219 = vdwg.mxu0
        %v1220 = vadd.f32 %v1171, %v1215
        %1221 = vst [vmem:[#allocation2] sm:$0xff] %v1220
        %p1222 = scmp.eq.s32.totalorder %s32, 1
        // Predicated region
        $region77: #{tpu_custom_call.1} parent=63 // pred_check
          %p1223 = pneg %p1222
        $region78: #{tpu_custom_call.1} parent=63 // pred_check_branch
          %1225 = sbr.rel (%p1223) target = $region80
        $region79: #{tpu_custom_call.1} parent=63 // pred_region
          %v1226 = vld [vmem:[#allocation2] sm:$0xff]
          %v1227 = vld [vmem:[%s481] sm:$0xff]
          %1229 = vset.pattern.permute.xlu0 0
          %1230 = vperm.xlu0 %1229, %v1227
          %v1231 = vpop.permute.xlu0 %1230
          %v1233 = vmul.f32 %v1226, %v1231
          %s1234 = sshra.s32 %s1157, 3
          %s1235 = sand.u32 %s1157, 7
          %s1236 = smul.addr %s1234, 4
          %s1237 = scalar_lea.vmem %s3, %s1236
          %v1238 = vld [vmem:[%s1237] sm:$0xf]
          %v1239 = vld [vmem:[#allocation3] sm:$0xf]
          %v1240 = vld [vmem:[#allocation3 + $0x4] sm:$0xf]
          %v1241 = vld [vmem:[#allocation3 + $0x8] sm:$0xf]
          %v1242 = vld [vmem:[#allocation3 + $0xc] sm:$0xf]
          %v1243 = vld [vmem:[#allocation3 + $0x10] sm:$0xf]
          %v1244 = vld [vmem:[#allocation3 + $0x14] sm:$0xf]
          %v1245 = vld [vmem:[#allocation3 + $0x18] sm:$0xf]
          %v1246 = vld [vmem:[#allocation3 + $0x1c] sm:$0xf]
          %v1247 = vld [vmem:[#allocation3 + $0x20] sm:$0xf]
          %v1248 = vld [vmem:[#allocation3 + $0x24] sm:$0xf]
          %v1249 = vld [vmem:[#allocation3 + $0x28] sm:$0xf]
          %v1250 = vld [vmem:[#allocation3 + $0x2c] sm:$0xf]
          %v1251 = vld [vmem:[#allocation3 + $0x30] sm:$0xf]
          %v1252 = vld [vmem:[#allocation3 + $0x34] sm:$0xf]
          %v1253 = vld [vmem:[#allocation3 + $0x38] sm:$0xf]
          %v1254 = vld [vmem:[#allocation3 + $0x3c] sm:$0xf]
          %v1255 = vpack.c.bf16 %v1233, %v1233
          %v1256 = vld [vmem:[#allocation6] sm:$0xf]
          %v1257 = vld [vmem:[#allocation6 + $0x4] sm:$0xf]
          %v1258 = vld [vmem:[#allocation6 + $0x8] sm:$0xf]
          %v1259 = vld [vmem:[#allocation6 + $0xc] sm:$0xf]
          %v1260 = vld [vmem:[#allocation6 + $0x10] sm:$0xf]
          %v1261 = vld [vmem:[#allocation6 + $0x14] sm:$0xf]
          %v1262 = vld [vmem:[#allocation6 + $0x18] sm:$0xf]
          %v1263 = vld [vmem:[#allocation6 + $0x1c] sm:$0xf]
          %v1264 = vld [vmem:[#allocation6 + $0x20] sm:$0xf]
          %v1265 = vld [vmem:[#allocation6 + $0x24] sm:$0xf]
          %v1266 = vld [vmem:[#allocation6 + $0x28] sm:$0xf]
          %v1267 = vld [vmem:[#allocation6 + $0x2c] sm:$0xf]
          %v1268 = vld [vmem:[#allocation6 + $0x30] sm:$0xf]
          %v1269 = vld [vmem:[#allocation6 + $0x34] sm:$0xf]
          %v1270 = vld [vmem:[#allocation6 + $0x38] sm:$0xf]
          %v1271 = vld [vmem:[#allocation6 + $0x3c] sm:$0xf]
          %v1288 = vunpack.c.l.b16 %v1256
          %v1289 = vunpack.c.l.b16 %v1257
          %v1290 = vunpack.c.l.b16 %v1258
          %v1291 = vunpack.c.l.b16 %v1259
          %v1292 = vunpack.c.l.b16 %v1260
          %v1293 = vunpack.c.l.b16 %v1261
          %v1294 = vunpack.c.l.b16 %v1262
          %v1295 = vunpack.c.l.b16 %v1263
          %v1296 = vunpack.c.l.b16 %v1264
          %v1297 = vunpack.c.l.b16 %v1265
          %v1298 = vunpack.c.l.b16 %v1266
          %v1299 = vunpack.c.l.b16 %v1267
          %v1300 = vunpack.c.l.b16 %v1268
          %v1301 = vunpack.c.l.b16 %v1269
          %v1302 = vunpack.c.l.b16 %v1270
          %v1303 = vunpack.c.l.b16 %v1271
          %v1304 = vpack.c.b16 %v1289, %v1288
          %v1305 = vpack.c.b16 %v1291, %v1290
          %v1306 = vpack.c.b16 %v1293, %v1292
          %v1307 = vpack.c.b16 %v1295, %v1294
          %v1308 = vpack.c.b16 %v1297, %v1296
          %v1309 = vpack.c.b16 %v1299, %v1298
          %v1310 = vpack.c.b16 %v1301, %v1300
          %v1311 = vpack.c.b16 %v1303, %v1302
          %1320 = vmatprep.subr.bf16.mxu0 0
          %1321 = vmatpush1.bf16.msra.mxu0 %v1304
          %1322 = vmatprep.subr.bf16.mxu0 0
          %1323 = vmatpush1.bf16.msra.mxu0 %v1305
          %1324 = vmatprep.subr.bf16.mxu0 0
          %1325 = vmatpush1.bf16.msra.mxu0 %v1306
          %1326 = vmatprep.subr.bf16.mxu0 0
          %1327 = vmatpush1.bf16.msra.mxu0 %v1307
          %1328 = vmatprep.subr.bf16.mxu0 0
          %1329 = vmatpush1.bf16.msra.mxu0 %v1308
          %1330 = vmatprep.subr.bf16.mxu0 0
          %1331 = vmatpush1.bf16.msra.mxu0 %v1309
          %1332 = vmatprep.subr.bf16.mxu0 0
          %1333 = vmatpush1.bf16.msra.mxu0 %v1310
          %1334 = vmatprep.subr.bf16.mxu0 0
          %1335 = vmatpush1.bf16.msra.mxu0 %v1311
          %1336 = vmatprep.subr.bf16.mxu0 0
          %1337 = vmatpush1.bf16.msra.mxu0 0
          %1338 = vmatprep.subr.bf16.mxu0 0
          %1339 = vmatpush1.bf16.msra.mxu0 0
          %1340 = vmatprep.subr.bf16.mxu0 0
          %1341 = vmatpush1.bf16.msra.mxu0 0
          %1342 = vmatprep.subr.bf16.mxu0 0
          %1343 = vmatpush1.bf16.msra.mxu0 0
          %1344 = vmatprep.subr.bf16.mxu0 0
          %1345 = vmatpush1.bf16.msra.mxu0 0
          %1346 = vmatprep.subr.bf16.mxu0 0
          %1347 = vmatpush1.bf16.msra.mxu0 0
          %1348 = vmatprep.subr.bf16.mxu0 0
          %1349 = vmatpush1.bf16.msra.mxu0 0
          %1350 = vmatprep.subr.bf16.mxu0 0
          %1351 = vmatpush1.bf16.msra.mxu0 0
          %1352 = vmatprep.mubr.bf16.mxu0 0
          %1353 = vmatmul.mubr.bf16.gmra.mrb[0].mxu0 %v1255
          %v1354 = vpop.f32.mrb[0].mxu0
          %v1355 = vadd.f32 0.0, %v1354
          %v1356 = vpop.f32.mrb[0].mxu0
          %v1357 = vpop.f32.mrb[0].mxu0
          %v1358 = vpop.f32.mrb[0].mxu0
          %1359 = vdwg.mxu0
          %v1376 = vunpack.c.l.b16 %v1239
          %v1377 = vunpack.c.l.b16 %v1240
          %v1378 = vunpack.c.l.b16 %v1241
          %v1379 = vunpack.c.l.b16 %v1242
          %v1380 = vunpack.c.l.b16 %v1243
          %v1381 = vunpack.c.l.b16 %v1244
          %v1382 = vunpack.c.l.b16 %v1245
          %v1383 = vunpack.c.l.b16 %v1246
          %v1384 = vunpack.c.l.b16 %v1247
          %v1385 = vunpack.c.l.b16 %v1248
          %v1386 = vunpack.c.l.b16 %v1249
          %v1387 = vunpack.c.l.b16 %v1250
          %v1388 = vunpack.c.l.b16 %v1251
          %v1389 = vunpack.c.l.b16 %v1252
          %v1390 = vunpack.c.l.b16 %v1253
          %v1391 = vunpack.c.l.b16 %v1254
          %v1392 = vpack.c.b16 %v1377, %v1376
          %v1393 = vpack.c.b16 %v1379, %v1378
          %v1394 = vpack.c.b16 %v1381, %v1380
          %v1395 = vpack.c.b16 %v1383, %v1382
          %v1396 = vpack.c.b16 %v1385, %v1384
          %v1397 = vpack.c.b16 %v1387, %v1386
          %v1398 = vpack.c.b16 %v1389, %v1388
          %v1399 = vpack.c.b16 %v1391, %v1390
          %1408 = vmatprep.subr.bf16.mxu0 0
          %1409 = vmatpush1.bf16.msra.mxu0 %v1392
          %1410 = vmatprep.subr.bf16.mxu0 0
          %1411 = vmatpush1.bf16.msra.mxu0 %v1393
          %1412 = vmatprep.subr.bf16.mxu0 0
          %1413 = vmatpush1.bf16.msra.mxu0 %v1394
          %1414 = vmatprep.subr.bf16.mxu0 0
          %1415 = vmatpush1.bf16.msra.mxu0 %v1395
          %1416 = vmatprep.subr.bf16.mxu0 0
          %1417 = vmatpush1.bf16.msra.mxu0 %v1396
          %1418 = vmatprep.subr.bf16.mxu0 0
          %1419 = vmatpush1.bf16.msra.mxu0 %v1397
          %1420 = vmatprep.subr.bf16.mxu0 0
          %1421 = vmatpush1.bf16.msra.mxu0 %v1398
          %1422 = vmatprep.subr.bf16.mxu0 0
          %1423 = vmatpush1.bf16.msra.mxu0 %v1399
          %1424 = vmatprep.subr.bf16.mxu0 0
          %1425 = vmatpush1.bf16.msra.mxu0 0
          %1426 = vmatprep.subr.bf16.mxu0 0
          %1427 = vmatpush1.bf16.msra.mxu0 0
          %1428 = vmatprep.subr.bf16.mxu0 0
          %1429 = vmatpush1.bf16.msra.mxu0 0
          %1430 = vmatprep.subr.bf16.mxu0 0
          %1431 = vmatpush1.bf16.msra.mxu0 0
          %1432 = vmatprep.subr.bf16.mxu0 0
          %1433 = vmatpush1.bf16.msra.mxu0 0
          %1434 = vmatprep.subr.bf16.mxu0 0
          %1435 = vmatpush1.bf16.msra.mxu0 0
          %1436 = vmatprep.subr.bf16.mxu0 0
          %1437 = vmatpush1.bf16.msra.mxu0 0
          %1438 = vmatprep.subr.bf16.mxu0 0
          %1439 = vmatpush1.bf16.msra.mxu0 0
          %1440 = vmatprep.mubr.bf16.mxu0 0
          %1441 = vmatmul.mubr.bf16.gmra.mrb[0].mxu0 %v1238
          %v1442 = vpop.f32.mrb[0].mxu0
          %v1443 = vadd.f32 %v1355, %v1442
          %v1444 = vpop.f32.mrb[0].mxu0
          %v1445 = vpop.f32.mrb[0].mxu0
          %v1446 = vpop.f32.mrb[0].mxu0
          %1447 = vdwg.mxu0
          %v1448 = vld [vmem:[%s10] sm:$0x1]
          %v1450 = vlaneseq
          %v1451 = vshrl.u32 %v1450, 7
          %v1452 = vsub.s32 0, %v1451
          %v1453 = vrot.slane %v1448, %v1452
          %v1455 = vadd.f32 %v1443, %v1453
          %v1456 = vmax.f32 %v1455, 0.0
          %1457 = vst [vmem:[%s462] sm:$0xff] %v1456
        $region80: #{tpu_custom_call.1} parent=63 // pred_fallthru
          _
        %s1458 = sand.u32 %s298, 1
        %s1459 = scalar_lea.sflag [#allocation5], %s1458
        %s1460 = sand.u32 %s298, 1
        %s1461 = smul.addr %s1460, 8
        %s1462 = scalar_lea.vmem [#allocation8], %s1461
        // Predicated region
        $region81: #{tpu_custom_call.1} parent=63 // pred_check
          %p1463 = pneg %p308
        $region82: #{tpu_custom_call.1} parent=63 // pred_check_branch
          %1465 = sbr.rel (%p1463) target = $region84
        $region83: #{tpu_custom_call.1} parent=63 // pred_region
          %s1467 = ssub.s32 128, 128
          %1468 = vsyncadd %s1459, %s1467
          %s1469 = smul.addr %s31, 128
          %s1470 = scalar_lea.hbm %s11, %s1469
          %s1472 = sshll.u32 %s1462, 4
          %s1473 = int_to_ptr.vmem [resolvable:$true] %s1472
          %1475 = dma.vmem_to_hbm [thread:$0]  %s1473, 128, %s1470, %s1459
        $region84: #{tpu_custom_call.1} parent=63 // pred_fallthru
          _
      $region64: #{tpu_custom_call.1} parent=5 // pred_fallthru
        _
      %p1476 = scmp.le.s32.totalorder 2, %s22
      // Predicated region
      $region85: #{tpu_custom_call.1} parent=5 // pred_check
        %p1477 = pneg %p1476
      $region86: #{tpu_custom_call.1} parent=5 // pred_check_branch
        %1479 = sbr.rel (%p1477) target = $region88
      $region87: #{tpu_custom_call.1} parent=5 // pred_region
        %s1480 = ssub.s32 %s22, 2
        // Predicated region
        $region89: #{tpu_custom_call.1} parent=87 // pred_check
          %p1481 = pneg %p314
        $region90: #{tpu_custom_call.1} parent=87 // pred_check_branch
          %1483 = sbr.rel (%p1481) target = $region92
        $region91: #{tpu_custom_call.1} parent=87 // pred_region
          %s1484 = sand.u32 %s299, 1
          %s1485 = scalar_lea.sflag [#allocation5], %s1484
          %s1486 = sand.u32 %s299, 1
          %s1487 = smul.addr %s1486, 8
          %s1488 = scalar_lea.vmem [#allocation8], %s1487
          %1489 = dma.done %s1485, 128
        $region92: #{tpu_custom_call.1} parent=87 // pred_fallthru
          _
      $region88: #{tpu_custom_call.1} parent=5 // pred_fallthru
        _
    $region6: #{tpu_custom_call.1} parent=1 // loop_footer
      %s26 = sadd.s32 1, %s22
    $region7: #{tpu_custom_call.1} parent=1 // loop_footer_branch
      %21 = sbr.rel target = $region3
    $region8: #{tpu_custom_call.1} parent=1 // loop_exit
      _
    %1490 = vsyncpa [#allocation4], 1
    %s1491 = scalar_lea.sflag [#allocation4], 1
    %1492 = vsyncpa %s1491, 1
    %1493 = vsyncpa [#allocation7], 1
    %1494 = vsyncpa [#allocation5], 1
    %s1495 = scalar_lea.sflag [#allocation5], 1
    %1496 = vsyncpa %s1495, 1

</llo_original>
